<compile_context>
chip_gen: v6e
topology: v6e:2x2x1
jax: 0.10.0
libtpu: 0.0.40
codegen_flags: <defaults>
</compile_context>

<pallas_src>
import jax
import jax.numpy as jnp
from jax.experimental import pallas as pl
from jax.experimental.pallas import tpu as pltpu

KH = KW = 3
NEG_SLOPE = 0.01
LANE = 128
SUBLANE = 8


# --------------------------------------------------------------------------
# Kernels
# --------------------------------------------------------------------------
def _conv_bn_lrelu_kernel_folded(xm_ref, xh_ref, w_ref, s_ref, b_ref, o_ref,
                                 win_ref):
    """dx folded into the contraction: K = 3*Cin, 3 MXU pushes per tile.

    xm_ref:  (TH, W+2, Cin)     bf16  main rows of the padded input tile
    xh_ref:  (2,  W+2, Cin)     bf16  2-row bottom halo
    w_ref:   (3, 3*Cin, TCO)    bf16  conv weights, dx folded into K
    s_ref:   (1, TCO)           f32   BN scale
    b_ref:   (1, TCO)           f32   BN bias
    o_ref:   (TH, W, TCO)             output tile (written once)
    win_ref: (TH+2, W, 3*Cin)   bf16  dx-folded halo'd window
    """
    TH, W, TCO = o_ref.shape
    Cin = xm_ref.shape[-1]

    # Three one-time shifted copies (lane offsets are multiples of 128 here).
    for dx in range(KW):
        lo = dx * Cin
        win_ref[0:TH, :, lo:lo + Cin] = xm_ref[:, dx:dx + W, :]
        win_ref[TH:TH + 2, :, lo:lo + Cin] = xh_ref[:, dx:dx + W, :]

    # 3 dy taps, K = 3*Cin, value-typed f32 accumulation (no o_ref RMW).
    acc = None
    for dy in range(KH):
        patch = win_ref[dy:dy + TH, :, :]                       # (TH, W, 3Cin)
        tap = jax.lax.dot_general(
            patch, w_ref[dy, :, :],
            dimension_numbers=(((2,), (0,)), ((), ())),
            preferred_element_type=jnp.float32)                  # (TH, W, TCO)
        acc = tap if acc is None else acc + tap

    y = acc * s_ref[...] + b_ref[...]
    o_ref[...] = jnp.where(y > 0.0, y, NEG_SLOPE * y).astype(o_ref.dtype)


def _conv_bn_lrelu_kernel_taps(xm_ref, xh_ref, w_ref, s_ref, b_ref, o_ref,
                               win_ref):
    """9 per-tap contractions (K = Cin); per-dx windows keep every scratch
    write and every dy tap slice aligned.

    w_ref:   (3, 3, Cin, TCO)   bf16
    win_ref: (3, TH+2, W, Cin)  bf16  per-dx shifted halo'd windows
    """
    TH, W, TCO = o_ref.shape

    for dx in range(KW):
        win_ref[dx, 0:TH, :, :] = xm_ref[:, dx:dx + W, :]
        win_ref[dx, TH:TH + 2, :, :] = xh_ref[:, dx:dx + W, :]

    acc = None
    for dy in range(KH):
        for dx in range(KW):
            patch = win_ref[dx, dy:dy + TH, :, :]                # (TH, W, Cin)
            tap = jax.lax.dot_general(
                patch, w_ref[dy, dx, :, :],
                dimension_numbers=(((2,), (0,)), ((), ())),
                preferred_element_type=jnp.float32)              # (TH, W, TCO)
            acc = tap if acc is None else acc + tap

    y = acc * s_ref[...] + b_ref[...]
    o_ref[...] = jnp.where(y > 0.0, y, NEG_SLOPE * y).astype(o_ref.dtype)


# --------------------------------------------------------------------------
# Sizing helpers (generation-aware)
# --------------------------------------------------------------------------
def _tpu_vmem_bytes():
    try:
        return int(pltpu.get_tpu_info().vmem_capacity_bytes)
    except Exception:
        return 64 << 20                      # conservative (v7x-sized) fallback


def _mxu_tile_width():
    """256 on v6e/v7x (256-wide MXU), 128 on older generations."""
    try:
        kind = jax.devices()[0].device_kind.lower()
    except Exception:
        return 256
    if any(tag in kind for tag in ("v2", "v3", "v4", "v5")):
        return 128
    return 256


def _working_set_bytes(th, w, wp, cin, tco, out_bytes):
    xm = 2 * (th * wp * cin * 2)             # double-buffered main input block
    xh = 2 * (2 * wp * cin * 2)              # double-buffered halo block
    wt = 2 * (KH * KW * cin * tco * 2)       # double-buffered weight block
    sb = 2 * (2 * tco * 4)                   # scale + bias blocks
    ot = 2 * (th * w * tco * out_bytes)      # double-buffered output block
    win = (th + 2) * w * KW * cin * 2        # window scratch (bf16)
    acc = th * w * tco * 4                   # f32 accumulator spill allowance
    return xm + xh + wt + sb + ot + win + acc


def _pick_tile_h(H, w, wp, cin, tco, out_bytes, budget):
    best = None
    th = SUBLANE
    while th <= H:
        if H % th == 0 and _working_set_bytes(th, w, wp, cin, tco,
                                              out_bytes) <= budget:
            best = th
        th += SUBLANE
    if best is None:                          # guard: smallest legal tile
        best = SUBLANE if H % SUBLANE == 0 else H
    return best


# --------------------------------------------------------------------------
# Wrapper
# --------------------------------------------------------------------------
def conv_bn_leaky_relu(x_nchw, weight, gamma, beta, running_mean, running_var,
                       eps=1e-5, *, tile_h=None, tile_co=None,
                       out_dtype=jnp.float32):
    """x_nchw: (N, Cin, H, W) f32; weight: (Cout, Cin, 3, 3) f32."""
    N, Cin, H, W = x_nchw.shape
    Cout = weight.shape[0]

    vmem_cap = _tpu_vmem_bytes()
    budget = int(vmem_cap * 0.7)

    # Lane-dense output channels (pad Cout to a multiple of 128).
    Cout_p = ((Cout + LANE - 1) // LANE) * LANE
    if tile_co is not None:
        TCO = tile_co
    else:
        TCO = min(Cout_p, _mxu_tile_width())
        if Cout_p % TCO != 0:
            TCO = LANE
    assert Cout_p % TCO == 0
    nco = Cout_p // TCO

    # Output width padded to a full sublane (unmasked vst).
    W8 = ((W + SUBLANE - 1) // SUBLANE) * SUBLANE
    Wp = W8 + 2

    out_bytes = jnp.dtype(out_dtype).itemsize
    TH = tile_h if tile_h is not None else _pick_tile_h(
        H, W8, Wp, Cin, TCO, out_bytes, budget)
    assert H % TH == 0, "tile_h must divide H"
    nh = H // TH

    # BatchNorm (running-stats / eval semantics) as an f32 epilogue.
    scale = (gamma / jnp.sqrt(running_var + eps)).astype(jnp.float32)
    bias = (beta - running_mean * scale).astype(jnp.float32)
    scale = jnp.pad(scale, (0, Cout_p - Cout)).reshape(1, Cout_p)
    bias = jnp.pad(bias, (0, Cout_p - Cout)).reshape(1, Cout_p)

    # Weights -> (3, 3, Cin, Cout_p) bf16; fold dx into K when lane-aligned.
    w = jnp.transpose(weight, (2, 3, 1, 0))
    w = jnp.pad(w, ((0, 0), (0, 0), (0, 0), (0, Cout_p - Cout)))
    w = w.astype(jnp.bfloat16)
    fold_dx = (Cin % LANE == 0)
    if fold_dx:
        w_kernel = w.reshape(KH, KW * Cin, Cout_p)
        kern = _conv_bn_lrelu_kernel_folded
        w_spec = pl.BlockSpec((KH, KW * Cin, TCO), lambda co, n, h: (0, 0, co))
        win_scratch = pltpu.VMEM((TH + 2, W8, KW * Cin), jnp.bfloat16)
    else:
        w_kernel = w
        kern = _conv_bn_lrelu_kernel_taps
        w_spec = pl.BlockSpec((KH, KW, Cin, TCO),
                              lambda co, n, h: (0, 0, 0, co))
        win_scratch = pltpu.VMEM((KW, TH + 2, W8, Cin), jnp.bfloat16)

    # Activations: NHWC bf16 with explicit zero halo (1px border + width pad).
    x = jnp.transpose(x_nchw, (0, 2, 3, 1)).astype(jnp.bfloat16)
    x_pad = jnp.pad(x, ((0, 0), (1, 1), (1, 1 + (W8 - W)), (0, 0)))  # (N,H+2,Wp,Cin)

    # 2-row bottom halo for every H tile, so both activation inputs stay on
    # plain Blocked (auto double-buffered) BlockSpecs.
    halo_idx = jnp.arange(nh)[:, None] * TH + TH + jnp.arange(2)[None, :]
    x_halo = x_pad[:, halo_idx]                                      # (N,nh,2,Wp,Cin)

    flops = 2 * N * H * W8 * Cout_p * KH * KW * Cin
    bytes_accessed = (x_pad.size * 2 + x_halo.size * 2 + w_kernel.size * 2
                      + (scale.size + bias.size) * 4
                      + N * H * W8 * Cout_p * out_bytes)

    out_nhwc = pl.pallas_call(
        kern,
        out_shape=jax.ShapeDtypeStruct((N, H, W8, Cout_p), out_dtype),
        grid_spec=pltpu.PrefetchScalarGridSpec(
            num_scalar_prefetch=0,
            # co is the slowest grid axis -> weight/scale/bias blocks are only
            # re-fetched nco times (not N*nh*nco times).
            grid=(nco, N, nh),
            in_specs=[
                pl.BlockSpec((pl.Squeezed(), TH, Wp, Cin),
                             lambda co, n, h: (n, h, 0, 0)),
                pl.BlockSpec((pl.Squeezed(), pl.Squeezed(), 2, Wp, Cin),
                             lambda co, n, h: (n, h, 0, 0, 0)),
                w_spec,
                pl.BlockSpec((1, TCO), lambda co, n, h: (0, co)),
                pl.BlockSpec((1, TCO), lambda co, n, h: (0, co)),
            ],
            out_specs=pl.BlockSpec((pl.Squeezed(), TH, W8, TCO),
                                   lambda co, n, h: (n, h, 0, co)),
            scratch_shapes=[win_scratch],
        ),
        compiler_params=pltpu.CompilerParams(
            dimension_semantics=("parallel", "parallel", "parallel"),
            vmem_limit_bytes=int(min(vmem_cap - (4 << 20),
                                     budget + (16 << 20)))),
        cost_estimate=pl.CostEstimate(flops=flops, transcendentals=0,
                                      bytes_accessed=bytes_accessed),
    )(x_pad, x_halo, w_kernel, scale, bias)

    # Drop width/channel padding, back to NCHW (module interface).
    return jnp.transpose(out_nhwc[:, :, :W, :Cout], (0, 3, 1, 2))


# --------------------------------------------------------------------------
# Reference + self-test
# --------------------------------------------------------------------------
def _reference(x_nchw, weight, gamma, beta, running_mean, running_var,
               eps=1e-5):
    y = jax.lax.conv_general_dilated(
        x_nchw, weight, window_strides=(1, 1), padding=((1, 1), (1, 1)),
        dimension_numbers=("NCHW", "OIHW", "NCHW"),
        precision=jax.lax.Precision.HIGHEST)
    scale = (gamma / jnp.sqrt(running_var + eps)).reshape(1, -1, 1, 1)
    bias = (beta - running_mean * gamma / jnp.sqrt(running_var + eps)).reshape(
        1, -1, 1, 1)
    y = y * scale + bias
    return jnp.where(y > 0, y, NEG_SLOPE * y)


if __name__ == "__main__":
    key = jax.random.PRNGKey(0)
    k_x, k_w, k_g, k_b, k_m, k_v = jax.random.split(key, 6)

    N, Cin, H, W = 2, 4, 16, 16
    Cout = 8

    x = jax.random.normal(k_x, (N, Cin, H, W), jnp.float32)
    weight = jax.random.normal(k_w, (Cout, Cin, KH, KW), jnp.float32) * 0.1
    gamma = jax.random.uniform(k_g, (Cout,), jnp.float32, 0.5, 1.5)
    beta = jax.random.normal(k_b, (Cout,), jnp.float32) * 0.1
    running_mean = jax.random.normal(k_m, (Cout,), jnp.float32) * 0.1
    running_var = jax.random.uniform(k_v, (Cout,), jnp.float32, 0.5, 1.5)

    # tile_h=8 -> 2 H-tiles per image, exercising the cross-tile halo path.
    out = conv_bn_leaky_relu(x, weight, gamma, beta, running_mean, running_var,
                             tile_h=8)
    out = jax.block_until_ready(out)

    ref = _reference(x, weight, gamma, beta, running_mean, running_var)
    assert out.shape == (N, Cout, H, W)
    assert out.dtype == jnp.float32
    # bf16 inputs/weights on the MXU (f32 accumulation, f32 BN epilogue) ->
    # quantization-level tolerance vs. the pure-f32 reference.
    assert jnp.allclose(out, ref, atol=5e-2, rtol=5e-2), "mismatch vs reference"

    print("KERNEL_OK")
</pallas_src>

<mosaic_0001>
module attributes {stable_mosaic.version = 11 : i64} {
  func.func @_conv_bn_lrelu_kernel_taps(%arg0: i32, %arg1: i32, %arg2: i32, %arg3: memref<1x8x18x4xbf16, #tpu.memory_space<vmem>>, %arg4: memref<1x1x2x18x4xbf16, #tpu.memory_space<vmem>>, %arg5: memref<3x3x4x128xbf16, #tpu.memory_space<vmem>>, %arg6: memref<1x128xf32, #tpu.memory_space<vmem>>, %arg7: memref<1x128xf32, #tpu.memory_space<vmem>>, %arg8: memref<1x8x16x128xf32, #tpu.memory_space<vmem>>, %arg9: memref<3x10x16x4xbf16, #tpu.memory_space<vmem>>) attributes {dimension_semantics = [#tpu.dimension_semantics<parallel>, #tpu.dimension_semantics<parallel>, #tpu.dimension_semantics<parallel>], iteration_bounds = array<i64: 1, 2, 2>, scalar_prefetch = 0 : i64, scratch_operands = 1 : i64, tpu.core_type = #tpu.core_type<tc>, window_params = [{transform_indices = @transform_0, window_bounds = array<i64: 1, 8, 18, 4>}, {transform_indices = @transform_1, window_bounds = array<i64: 1, 1, 2, 18, 4>}, {transform_indices = @transform_2, window_bounds = array<i64: 3, 3, 4, 128>}, {transform_indices = @transform_3, window_bounds = array<i64: 1, 128>}, {transform_indices = @transform_4, window_bounds = array<i64: 1, 128>}, {transform_indices = @transform_5, window_bounds = array<i64: 1, 8, 16, 128>}]} {
    %c0 = arith.constant 0 : index
    %c0_0 = arith.constant 0 : index
    %c0_1 = arith.constant 0 : index
    %c0_2 = arith.constant 0 : index
    %0 = vector.load %arg3[%c0, %c0_0, %c0_1, %c0_2] : memref<1x8x18x4xbf16, #tpu.memory_space<vmem>>, vector<1x8x16x4xbf16>
    %1 = vector.shape_cast %0 : vector<1x8x16x4xbf16> to vector<8x16x4xbf16>
    %c0_3 = arith.constant 0 : index
    %c0_4 = arith.constant 0 : index
    %c0_5 = arith.constant 0 : index
    %c0_6 = arith.constant 0 : index
    %2 = vector.load %arg9[%c0_3, %c0_4, %c0_5, %c0_6] : memref<3x10x16x4xbf16, #tpu.memory_space<vmem>>, vector<1x8x16x4xbf16>
    %3 = vector.shape_cast %2 : vector<1x8x16x4xbf16> to vector<8x16x4xbf16>
    %4 = vector.shape_cast %1 : vector<8x16x4xbf16> to vector<1x8x16x4xbf16>
    tpu.vector_store %arg9[%c0_3, %c0_4, %c0_5, %c0_6], %4 {strides = array<i32>} : memref<3x10x16x4xbf16, #tpu.memory_space<vmem>>, vector<1x8x16x4xbf16>,
    %c0_7 = arith.constant 0 : index
    %c0_8 = arith.constant 0 : index
    %c0_9 = arith.constant 0 : index
    %c0_10 = arith.constant 0 : index
    %c0_11 = arith.constant 0 : index
    %5 = vector.load %arg4[%c0_7, %c0_8, %c0_9, %c0_10, %c0_11] : memref<1x1x2x18x4xbf16, #tpu.memory_space<vmem>>, vector<1x1x2x16x4xbf16>
    %6 = vector.shape_cast %5 : vector<1x1x2x16x4xbf16> to vector<2x16x4xbf16>
    %c0_12 = arith.constant 0 : index
    %c8 = arith.constant 8 : index
    %c0_13 = arith.constant 0 : index
    %c0_14 = arith.constant 0 : index
    %7 = vector.load %arg9[%c0_12, %c8, %c0_13, %c0_14] : memref<3x10x16x4xbf16, #tpu.memory_space<vmem>>, vector<1x2x16x4xbf16>
    %8 = vector.shape_cast %7 : vector<1x2x16x4xbf16> to vector<2x16x4xbf16>
    %9 = vector.shape_cast %6 : vector<2x16x4xbf16> to vector<1x2x16x4xbf16>
    tpu.vector_store %arg9[%c0_12, %c8, %c0_13, %c0_14], %9 {strides = array<i32>} : memref<3x10x16x4xbf16, #tpu.memory_space<vmem>>, vector<1x2x16x4xbf16>,
    %c0_15 = arith.constant 0 : index
    %c0_16 = arith.constant 0 : index
    %c1 = arith.constant 1 : index
    %c0_17 = arith.constant 0 : index
    %10 = vector.load %arg3[%c0_15, %c0_16, %c1, %c0_17] : memref<1x8x18x4xbf16, #tpu.memory_space<vmem>>, vector<1x8x16x4xbf16>
    %11 = vector.shape_cast %10 : vector<1x8x16x4xbf16> to vector<8x16x4xbf16>
    %c1_18 = arith.constant 1 : index
    %c0_19 = arith.constant 0 : index
    %c0_20 = arith.constant 0 : index
    %c0_21 = arith.constant 0 : index
    %12 = vector.load %arg9[%c1_18, %c0_19, %c0_20, %c0_21] : memref<3x10x16x4xbf16, #tpu.memory_space<vmem>>, vector<1x8x16x4xbf16>
    %13 = vector.shape_cast %12 : vector<1x8x16x4xbf16> to vector<8x16x4xbf16>
    %14 = vector.shape_cast %11 : vector<8x16x4xbf16> to vector<1x8x16x4xbf16>
    tpu.vector_store %arg9[%c1_18, %c0_19, %c0_20, %c0_21], %14 {strides = array<i32>} : memref<3x10x16x4xbf16, #tpu.memory_space<vmem>>, vector<1x8x16x4xbf16>,
    %c0_22 = arith.constant 0 : index
    %c0_23 = arith.constant 0 : index
    %c0_24 = arith.constant 0 : index
    %c1_25 = arith.constant 1 : index
    %c0_26 = arith.constant 0 : index
    %15 = vector.load %arg4[%c0_22, %c0_23, %c0_24, %c1_25, %c0_26] : memref<1x1x2x18x4xbf16, #tpu.memory_space<vmem>>, vector<1x1x2x16x4xbf16>
    %16 = vector.shape_cast %15 : vector<1x1x2x16x4xbf16> to vector<2x16x4xbf16>
    %c1_27 = arith.constant 1 : index
    %c8_28 = arith.constant 8 : index
    %c0_29 = arith.constant 0 : index
    %c0_30 = arith.constant 0 : index
    %17 = vector.load %arg9[%c1_27, %c8_28, %c0_29, %c0_30] : memref<3x10x16x4xbf16, #tpu.memory_space<vmem>>, vector<1x2x16x4xbf16>
    %18 = vector.shape_cast %17 : vector<1x2x16x4xbf16> to vector<2x16x4xbf16>
    %19 = vector.shape_cast %16 : vector<2x16x4xbf16> to vector<1x2x16x4xbf16>
    tpu.vector_store %arg9[%c1_27, %c8_28, %c0_29, %c0_30], %19 {strides = array<i32>} : memref<3x10x16x4xbf16, #tpu.memory_space<vmem>>, vector<1x2x16x4xbf16>,
    %c0_31 = arith.constant 0 : index
    %c0_32 = arith.constant 0 : index
    %c2 = arith.constant 2 : index
    %c0_33 = arith.constant 0 : index
    %20 = vector.load %arg3[%c0_31, %c0_32, %c2, %c0_33] : memref<1x8x18x4xbf16, #tpu.memory_space<vmem>>, vector<1x8x16x4xbf16>
    %21 = vector.shape_cast %20 : vector<1x8x16x4xbf16> to vector<8x16x4xbf16>
    %c2_34 = arith.constant 2 : index
    %c0_35 = arith.constant 0 : index
    %c0_36 = arith.constant 0 : index
    %c0_37 = arith.constant 0 : index
    %22 = vector.load %arg9[%c2_34, %c0_35, %c0_36, %c0_37] : memref<3x10x16x4xbf16, #tpu.memory_space<vmem>>, vector<1x8x16x4xbf16>
    %23 = vector.shape_cast %22 : vector<1x8x16x4xbf16> to vector<8x16x4xbf16>
    %24 = vector.shape_cast %21 : vector<8x16x4xbf16> to vector<1x8x16x4xbf16>
    tpu.vector_store %arg9[%c2_34, %c0_35, %c0_36, %c0_37], %24 {strides = array<i32>} : memref<3x10x16x4xbf16, #tpu.memory_space<vmem>>, vector<1x8x16x4xbf16>,
    %c0_38 = arith.constant 0 : index
    %c0_39 = arith.constant 0 : index
    %c0_40 = arith.constant 0 : index
    %c2_41 = arith.constant 2 : index
    %c0_42 = arith.constant 0 : index
    %25 = vector.load %arg4[%c0_38, %c0_39, %c0_40, %c2_41, %c0_42] : memref<1x1x2x18x4xbf16, #tpu.memory_space<vmem>>, vector<1x1x2x16x4xbf16>
    %26 = vector.shape_cast %25 : vector<1x1x2x16x4xbf16> to vector<2x16x4xbf16>
    %c2_43 = arith.constant 2 : index
    %c8_44 = arith.constant 8 : index
    %c0_45 = arith.constant 0 : index
    %c0_46 = arith.constant 0 : index
    %27 = vector.load %arg9[%c2_43, %c8_44, %c0_45, %c0_46] : memref<3x10x16x4xbf16, #tpu.memory_space<vmem>>, vector<1x2x16x4xbf16>
    %28 = vector.shape_cast %27 : vector<1x2x16x4xbf16> to vector<2x16x4xbf16>
    %29 = vector.shape_cast %26 : vector<2x16x4xbf16> to vector<1x2x16x4xbf16>
    tpu.vector_store %arg9[%c2_43, %c8_44, %c0_45, %c0_46], %29 {strides = array<i32>} : memref<3x10x16x4xbf16, #tpu.memory_space<vmem>>, vector<1x2x16x4xbf16>,
    %c0_47 = arith.constant 0 : index
    %c0_48 = arith.constant 0 : index
    %c0_49 = arith.constant 0 : index
    %c0_50 = arith.constant 0 : index
    %30 = vector.load %arg9[%c0_47, %c0_48, %c0_49, %c0_50] : memref<3x10x16x4xbf16, #tpu.memory_space<vmem>>, vector<1x8x16x4xbf16>
    %31 = vector.shape_cast %30 : vector<1x8x16x4xbf16> to vector<8x16x4xbf16>
    %c0_51 = arith.constant 0 : index
    %c0_52 = arith.constant 0 : index
    %c0_53 = arith.constant 0 : index
    %c0_54 = arith.constant 0 : index
    %32 = vector.load %arg5[%c0_51, %c0_52, %c0_53, %c0_54] : memref<3x3x4x128xbf16, #tpu.memory_space<vmem>>, vector<1x1x4x128xbf16>
    %33 = vector.shape_cast %32 : vector<1x1x4x128xbf16> to vector<4x128xbf16>
    %cst = arith.constant dense<0.000000e+00> : vector<8x16x128xf32>
    %34 = tpu.matmul %31, %33, %cst {dimension_numbers = #tpu.dot_dimension_numbers<[2], [0], [0, 1], [1], [0, 0, 0, 1, 1, 1], [], []>} : vector<8x16x4xbf16>, vector<4x128xbf16>, vector<8x16x128xf32> -> vector<8x16x128xf32>
    %c1_55 = arith.constant 1 : index
    %c0_56 = arith.constant 0 : index
    %c0_57 = arith.constant 0 : index
    %c0_58 = arith.constant 0 : index
    %35 = vector.load %arg9[%c1_55, %c0_56, %c0_57, %c0_58] : memref<3x10x16x4xbf16, #tpu.memory_space<vmem>>, vector<1x8x16x4xbf16>
    %36 = vector.shape_cast %35 : vector<1x8x16x4xbf16> to vector<8x16x4xbf16>
    %c0_59 = arith.constant 0 : index
    %c1_60 = arith.constant 1 : index
    %c0_61 = arith.constant 0 : index
    %c0_62 = arith.constant 0 : index
    %37 = vector.load %arg5[%c0_59, %c1_60, %c0_61, %c0_62] : memref<3x3x4x128xbf16, #tpu.memory_space<vmem>>, vector<1x1x4x128xbf16>
    %38 = vector.shape_cast %37 : vector<1x1x4x128xbf16> to vector<4x128xbf16>
    %cst_63 = arith.constant dense<0.000000e+00> : vector<8x16x128xf32>
    %39 = tpu.matmul %36, %38, %cst_63 {dimension_numbers = #tpu.dot_dimension_numbers<[2], [0], [0, 1], [1], [0, 0, 0, 1, 1, 1], [], []>} : vector<8x16x4xbf16>, vector<4x128xbf16>, vector<8x16x128xf32> -> vector<8x16x128xf32>
    %40 = arith.addf %34, %39 : vector<8x16x128xf32>
    %c2_64 = arith.constant 2 : index
    %c0_65 = arith.constant 0 : index
    %c0_66 = arith.constant 0 : index
    %c0_67 = arith.constant 0 : index
    %41 = vector.load %arg9[%c2_64, %c0_65, %c0_66, %c0_67] : memref<3x10x16x4xbf16, #tpu.memory_space<vmem>>, vector<1x8x16x4xbf16>
    %42 = vector.shape_cast %41 : vector<1x8x16x4xbf16> to vector<8x16x4xbf16>
    %c0_68 = arith.constant 0 : index
    %c2_69 = arith.constant 2 : index
    %c0_70 = arith.constant 0 : index
    %c0_71 = arith.constant 0 : index
    %43 = vector.load %arg5[%c0_68, %c2_69, %c0_70, %c0_71] : memref<3x3x4x128xbf16, #tpu.memory_space<vmem>>, vector<1x1x4x128xbf16>
    %44 = vector.shape_cast %43 : vector<1x1x4x128xbf16> to vector<4x128xbf16>
    %cst_72 = arith.constant dense<0.000000e+00> : vector<8x16x128xf32>
    %45 = tpu.matmul %42, %44, %cst_72 {dimension_numbers = #tpu.dot_dimension_numbers<[2], [0], [0, 1], [1], [0, 0, 0, 1, 1, 1], [], []>} : vector<8x16x4xbf16>, vector<4x128xbf16>, vector<8x16x128xf32> -> vector<8x16x128xf32>
    %46 = arith.addf %40, %45 : vector<8x16x128xf32>
    %c0_73 = arith.constant 0 : index
    %c1_74 = arith.constant 1 : index
    %c0_75 = arith.constant 0 : index
    %c0_76 = arith.constant 0 : index
    %47 = vector.load %arg9[%c0_73, %c1_74, %c0_75, %c0_76] : memref<3x10x16x4xbf16, #tpu.memory_space<vmem>>, vector<1x8x16x4xbf16>
    %48 = vector.shape_cast %47 : vector<1x8x16x4xbf16> to vector<8x16x4xbf16>
    %c1_77 = arith.constant 1 : index
    %c0_78 = arith.constant 0 : index
    %c0_79 = arith.constant 0 : index
    %c0_80 = arith.constant 0 : index
    %49 = vector.load %arg5[%c1_77, %c0_78, %c0_79, %c0_80] : memref<3x3x4x128xbf16, #tpu.memory_space<vmem>>, vector<1x1x4x128xbf16>
    %50 = vector.shape_cast %49 : vector<1x1x4x128xbf16> to vector<4x128xbf16>
    %cst_81 = arith.constant dense<0.000000e+00> : vector<8x16x128xf32>
    %51 = tpu.matmul %48, %50, %cst_81 {dimension_numbers = #tpu.dot_dimension_numbers<[2], [0], [0, 1], [1], [0, 0, 0, 1, 1, 1], [], []>} : vector<8x16x4xbf16>, vector<4x128xbf16>, vector<8x16x128xf32> -> vector<8x16x128xf32>
    %52 = arith.addf %46, %51 : vector<8x16x128xf32>
    %c1_82 = arith.constant 1 : index
    %c1_83 = arith.constant 1 : index
    %c0_84 = arith.constant 0 : index
    %c0_85 = arith.constant 0 : index
    %53 = vector.load %arg9[%c1_82, %c1_83, %c0_84, %c0_85] : memref<3x10x16x4xbf16, #tpu.memory_space<vmem>>, vector<1x8x16x4xbf16>
    %54 = vector.shape_cast %53 : vector<1x8x16x4xbf16> to vector<8x16x4xbf16>
    %c1_86 = arith.constant 1 : index
    %c1_87 = arith.constant 1 : index
    %c0_88 = arith.constant 0 : index
    %c0_89 = arith.constant 0 : index
    %55 = vector.load %arg5[%c1_86, %c1_87, %c0_88, %c0_89] : memref<3x3x4x128xbf16, #tpu.memory_space<vmem>>, vector<1x1x4x128xbf16>
    %56 = vector.shape_cast %55 : vector<1x1x4x128xbf16> to vector<4x128xbf16>
    %cst_90 = arith.constant dense<0.000000e+00> : vector<8x16x128xf32>
    %57 = tpu.matmul %54, %56, %cst_90 {dimension_numbers = #tpu.dot_dimension_numbers<[2], [0], [0, 1], [1], [0, 0, 0, 1, 1, 1], [], []>} : vector<8x16x4xbf16>, vector<4x128xbf16>, vector<8x16x128xf32> -> vector<8x16x128xf32>
    %58 = arith.addf %52, %57 : vector<8x16x128xf32>
    %c2_91 = arith.constant 2 : index
    %c1_92 = arith.constant 1 : index
    %c0_93 = arith.constant 0 : index
    %c0_94 = arith.constant 0 : index
    %59 = vector.load %arg9[%c2_91, %c1_92, %c0_93, %c0_94] : memref<3x10x16x4xbf16, #tpu.memory_space<vmem>>, vector<1x8x16x4xbf16>
    %60 = vector.shape_cast %59 : vector<1x8x16x4xbf16> to vector<8x16x4xbf16>
    %c1_95 = arith.constant 1 : index
    %c2_96 = arith.constant 2 : index
    %c0_97 = arith.constant 0 : index
    %c0_98 = arith.constant 0 : index
    %61 = vector.load %arg5[%c1_95, %c2_96, %c0_97, %c0_98] : memref<3x3x4x128xbf16, #tpu.memory_space<vmem>>, vector<1x1x4x128xbf16>
    %62 = vector.shape_cast %61 : vector<1x1x4x128xbf16> to vector<4x128xbf16>
    %cst_99 = arith.constant dense<0.000000e+00> : vector<8x16x128xf32>
    %63 = tpu.matmul %60, %62, %cst_99 {dimension_numbers = #tpu.dot_dimension_numbers<[2], [0], [0, 1], [1], [0, 0, 0, 1, 1, 1], [], []>} : vector<8x16x4xbf16>, vector<4x128xbf16>, vector<8x16x128xf32> -> vector<8x16x128xf32>
    %64 = arith.addf %58, %63 : vector<8x16x128xf32>
    %c0_100 = arith.constant 0 : index
    %c2_101 = arith.constant 2 : index
    %c0_102 = arith.constant 0 : index
    %c0_103 = arith.constant 0 : index
    %65 = vector.load %arg9[%c0_100, %c2_101, %c0_102, %c0_103] : memref<3x10x16x4xbf16, #tpu.memory_space<vmem>>, vector<1x8x16x4xbf16>
    %66 = vector.shape_cast %65 : vector<1x8x16x4xbf16> to vector<8x16x4xbf16>
    %c2_104 = arith.constant 2 : index
    %c0_105 = arith.constant 0 : index
    %c0_106 = arith.constant 0 : index
    %c0_107 = arith.constant 0 : index
    %67 = vector.load %arg5[%c2_104, %c0_105, %c0_106, %c0_107] : memref<3x3x4x128xbf16, #tpu.memory_space<vmem>>, vector<1x1x4x128xbf16>
    %68 = vector.shape_cast %67 : vector<1x1x4x128xbf16> to vector<4x128xbf16>
    %cst_108 = arith.constant dense<0.000000e+00> : vector<8x16x128xf32>
    %69 = tpu.matmul %66, %68, %cst_108 {dimension_numbers = #tpu.dot_dimension_numbers<[2], [0], [0, 1], [1], [0, 0, 0, 1, 1, 1], [], []>} : vector<8x16x4xbf16>, vector<4x128xbf16>, vector<8x16x128xf32> -> vector<8x16x128xf32>
    %70 = arith.addf %64, %69 : vector<8x16x128xf32>
    %c1_109 = arith.constant 1 : index
    %c2_110 = arith.constant 2 : index
    %c0_111 = arith.constant 0 : index
    %c0_112 = arith.constant 0 : index
    %71 = vector.load %arg9[%c1_109, %c2_110, %c0_111, %c0_112] : memref<3x10x16x4xbf16, #tpu.memory_space<vmem>>, vector<1x8x16x4xbf16>
    %72 = vector.shape_cast %71 : vector<1x8x16x4xbf16> to vector<8x16x4xbf16>
    %c2_113 = arith.constant 2 : index
    %c1_114 = arith.constant 1 : index
    %c0_115 = arith.constant 0 : index
    %c0_116 = arith.constant 0 : index
    %73 = vector.load %arg5[%c2_113, %c1_114, %c0_115, %c0_116] : memref<3x3x4x128xbf16, #tpu.memory_space<vmem>>, vector<1x1x4x128xbf16>
    %74 = vector.shape_cast %73 : vector<1x1x4x128xbf16> to vector<4x128xbf16>
    %cst_117 = arith.constant dense<0.000000e+00> : vector<8x16x128xf32>
    %75 = tpu.matmul %72, %74, %cst_117 {dimension_numbers = #tpu.dot_dimension_numbers<[2], [0], [0, 1], [1], [0, 0, 0, 1, 1, 1], [], []>} : vector<8x16x4xbf16>, vector<4x128xbf16>, vector<8x16x128xf32> -> vector<8x16x128xf32>
    %76 = arith.addf %70, %75 : vector<8x16x128xf32>
    %c2_118 = arith.constant 2 : index
    %c2_119 = arith.constant 2 : index
    %c0_120 = arith.constant 0 : index
    %c0_121 = arith.constant 0 : index
    %77 = vector.load %arg9[%c2_118, %c2_119, %c0_120, %c0_121] : memref<3x10x16x4xbf16, #tpu.memory_space<vmem>>, vector<1x8x16x4xbf16>
    %78 = vector.shape_cast %77 : vector<1x8x16x4xbf16> to vector<8x16x4xbf16>
    %c2_122 = arith.constant 2 : index
    %c2_123 = arith.constant 2 : index
    %c0_124 = arith.constant 0 : index
    %c0_125 = arith.constant 0 : index
    %79 = vector.load %arg5[%c2_122, %c2_123, %c0_124, %c0_125] : memref<3x3x4x128xbf16, #tpu.memory_space<vmem>>, vector<1x1x4x128xbf16>
    %80 = vector.shape_cast %79 : vector<1x1x4x128xbf16> to vector<4x128xbf16>
    %cst_126 = arith.constant dense<0.000000e+00> : vector<8x16x128xf32>
    %81 = tpu.matmul %78, %80, %cst_126 {dimension_numbers = #tpu.dot_dimension_numbers<[2], [0], [0, 1], [1], [0, 0, 0, 1, 1, 1], [], []>} : vector<8x16x4xbf16>, vector<4x128xbf16>, vector<8x16x128xf32> -> vector<8x16x128xf32>
    %82 = arith.addf %76, %81 : vector<8x16x128xf32>
    %c0_127 = arith.constant 0 : index
    %c0_128 = arith.constant 0 : index
    %83 = vector.load %arg6[%c0_127, %c0_128] : memref<1x128xf32, #tpu.memory_space<vmem>>, vector<1x128xf32>
    %84 = vector.shape_cast %83 : vector<1x128xf32> to vector<1x1x128xf32>
    %85 = vector.broadcast %84 : vector<1x1x128xf32> to vector<8x16x128xf32>
    %86 = arith.mulf %82, %85 : vector<8x16x128xf32>
    %c0_129 = arith.constant 0 : index
    %c0_130 = arith.constant 0 : index
    %87 = vector.load %arg7[%c0_129, %c0_130] : memref<1x128xf32, #tpu.memory_space<vmem>>, vector<1x128xf32>
    %88 = vector.shape_cast %87 : vector<1x128xf32> to vector<1x1x128xf32>
    %89 = vector.broadcast %88 : vector<1x1x128xf32> to vector<8x16x128xf32>
    %90 = arith.addf %86, %89 : vector<8x16x128xf32>
    %cst_131 = arith.constant 0.000000e+00 : f32
    %91 = vector.broadcast %cst_131 : f32 to vector<8x16x128xf32>
    %92 = arith.cmpf ogt, %90, %91 : vector<8x16x128xf32>
    %cst_132 = arith.constant 0.00999999977 : f32
    %93 = vector.broadcast %cst_132 : f32 to vector<8x16x128xf32>
    %94 = arith.mulf %93, %90 : vector<8x16x128xf32>
    %95 = arith.select %92, %90, %94 : vector<8x16x128xi1>, vector<8x16x128xf32>
    %c0_133 = arith.constant 0 : index
    %c0_134 = arith.constant 0 : index
    %c0_135 = arith.constant 0 : index
    %c0_136 = arith.constant 0 : index
    %96 = vector.load %arg8[%c0_133, %c0_134, %c0_135, %c0_136] : memref<1x8x16x128xf32, #tpu.memory_space<vmem>>, vector<1x8x16x128xf32>
    %97 = vector.shape_cast %96 : vector<1x8x16x128xf32> to vector<8x16x128xf32>
    %98 = vector.shape_cast %95 : vector<8x16x128xf32> to vector<1x8x16x128xf32>
    tpu.vector_store %arg8[%c0_133, %c0_134, %c0_135, %c0_136], %98 {strides = array<i32>} : memref<1x8x16x128xf32, #tpu.memory_space<vmem>>, vector<1x8x16x128xf32>,
    return
  }
  func.func @transform_0(%arg0: i32, %arg1: i32, %arg2: i32) -> (i32, i32, i32, i32) {
    %c0_i32 = arith.constant 0 : i32
    %c0_i32_0 = arith.constant 0 : i32
    %c0_i32_1 = arith.constant 0 : i32
    return %arg1, %arg2, %c0_i32, %c0_i32_0 : i32, i32, i32, i32
  }
  func.func @transform_1(%arg0: i32, %arg1: i32, %arg2: i32) -> (i32, i32, i32, i32, i32) {
    %c0_i32 = arith.constant 0 : i32
    %c0_i32_0 = arith.constant 0 : i32
    %c0_i32_1 = arith.constant 0 : i32
    %c0_i32_2 = arith.constant 0 : i32
    return %arg1, %arg2, %c0_i32, %c0_i32_0, %c0_i32_1 : i32, i32, i32, i32, i32
  }
  func.func @transform_2(%arg0: i32, %arg1: i32, %arg2: i32) -> (i32, i32, i32, i32) {
    %c0_i32 = arith.constant 0 : i32
    %c0_i32_0 = arith.constant 0 : i32
    %c0_i32_1 = arith.constant 0 : i32
    %c0_i32_2 = arith.constant 0 : i32
    return %c0_i32, %c0_i32_0, %c0_i32_1, %arg0 : i32, i32, i32, i32
  }
  func.func @transform_3(%arg0: i32, %arg1: i32, %arg2: i32) -> (i32, i32) {
    %c0_i32 = arith.constant 0 : i32
    %c0_i32_0 = arith.constant 0 : i32
    return %c0_i32, %arg0 : i32, i32
  }
  func.func @transform_4(%arg0: i32, %arg1: i32, %arg2: i32) -> (i32, i32) {
    %c0_i32 = arith.constant 0 : i32
    %c0_i32_0 = arith.constant 0 : i32
    return %c0_i32, %arg0 : i32, i32
  }
  func.func @transform_5(%arg0: i32, %arg1: i32, %arg2: i32) -> (i32, i32, i32, i32) {
    %c0_i32 = arith.constant 0 : i32
    %c0_i32_0 = arith.constant 0 : i32
    return %arg1, %arg2, %c0_i32, %arg0 : i32, i32, i32, i32
  }
}

</mosaic_0001>

<llo_original>
// kernel: tpu_custom_call.1
$region0: #{tpu_custom_call.1}
  #allocation0 [shape = 'u32[]', space=smem, size = 0x4, offset = 0x4, fixed_abs, tag = 'smem constant byte address 0x4 - core index']
  #allocation1 [shape = 'u32[144,128]{1,0:T(1,128)}', space=vmem, size = 0x12000, scoped, tag = 'internal scratch']
  #allocation2 [shape = 'bf16[3,10,16,4]{3,2,1,0:T(8,128)(2,1)}', space=vmem, size = 0x1e000, scoped, tag = 'scratch operand']
  %s0 = inlined_call_operand.vmem [shape: bf16[2,18,18,4], index: 0, kind: input, shape index: {}]
  %s1 = inlined_call_operand.vmem [shape: bf16[2,2,2,18,4], index: 1, kind: input, shape index: {}]
  %s2 = inlined_call_operand.vmem [shape: bf16[3,3,4,128], index: 2, kind: input, shape index: {}]
  %s3 = inlined_call_operand.vmem [shape: f32[1,128], index: 3, kind: input, shape index: {}]
  %s4 = inlined_call_operand.vmem [shape: f32[1,128], index: 4, kind: input, shape index: {}]
  %s5 = inlined_call_operand.hbm [shape: f32[2,16,16,128], index: 5, kind: output, shape index: {}]
  %s6 = sld [smem:[#allocation0]]
  $region53: #{tpu_custom_call.1} parent=0
    _
  %s8 = ssub.s32 1, %s6
  %s9 = scalar_select 0, %s8, %s6
  $region1: #{tpu_custom_call.1} parent=0
    #allocation3 [shape = 'u8[131072]{0}', space=vmem, size = 0x20000, scoped, tag = 'output window, operand 0']
    #allocation4 [shape = 's32[2]{0}', space=sflag, size = 0x8, scoped, tag = 'scoped memory for tpu_custom_call.1']
    %10 = vsyncpa [#allocation4], 0
    %s11 = scalar_lea.sflag [#allocation4], 1
    %12 = vsyncpa %s11, 0
    loop: start=0, step=1, limit=6
    $region2: #{tpu_custom_call.1} parent=1 // loop_pre_header
      _
    $region3: #{tpu_custom_call.1} parent=1 // loop_header
      %s14 = sphi 0, %s18
      %p15 = scmp.ge.s32.totalorder %s14, 6
      %s21 = sphi 0, %s40
      %s22 = sphi 0, %s36
      %s23 = sphi 0, %s32
      %s24 = sphi 0, %s21
      %s25 = sphi 0, %s22
      %s26 = sphi 0, %s23
      %s27 = sphi 0, %s24
      %s28 = sphi 0, %s25
      %s29 = sphi 0, %s26
      %s45 = sphi 0, %s47
      %s48 = sphi 0, %s45
      %s49 = sphi 0, %s48
      %s65 = sphi 0, %s49
      %s73 = sphi 0, %s75
      %s76 = sphi 0, %s73
      %s77 = sphi 0, %s76
      %s93 = sphi 0, %s77
      %s99 = sphi 0, %s101
      %s102 = sphi 0, %s99
      %s103 = sphi 0, %s102
      %s119 = sphi 0, %s103
      %s125 = sphi 0, %s127
      %s128 = sphi 0, %s125
      %s129 = sphi 0, %s128
      %s145 = sphi 0, %s129
      %s151 = sphi 0, %s153
      %s154 = sphi 0, %s151
      %s155 = sphi 0, %s154
      %s171 = sphi 0, %s155
      %s181 = sphi 0, %s183
      %s184 = sphi 0, %s181
      %s185 = sphi 0, %s184
      %s201 = sphi 0, %s185
    $region4: #{tpu_custom_call.1} parent=1 // loop_header_branch
      %17 = sbr.rel (%p15) target = $region8
    $region5: #{tpu_custom_call.1} parent=1 // loop_body
      %s19 = ssub.s32 %s14, 1
      %s20 = ssub.s32 %s14, 2
      %s30 = sadd.s32 1, %s23
      %p31 = scmp.ge.s32.totalorder %s30, 2
      %s32 = scalar_select %p31, 0, %s30
      %s33 = sadd.s32 1, %s22
      %s34 = scalar_select %p31, %s33, %s22
      %p35 = scmp.ge.s32.totalorder %s34, 2
      %s36 = scalar_select %p35, 0, %s34
      %s37 = sadd.s32 1, %s21
      %s38 = scalar_select %p35, %s37, %s21
      %p39 = scmp.ge.s32.totalorder %s38, 1
      %s40 = scalar_select %p39, 0, %s38
      %s41 = ssub.s32 %s22, %s36
      %s42 = ssub.s32 %s23, %s32
      %s43 = sor.u32 %s41, %s42
      %p44 = scmp.eq.s32.totalorder %s43, 0
      %s46 = sadd.s32 %s45, 1
      %s47 = scalar_select %p44, %s45, %s46
      %p50 = pneg %p44
      %p51 = scmp.eq.s32.totalorder %s14, 3
      %p52 = por %p50, %p51
      %p53 = scmp.ne.s32.totalorder %s45, %s48
      %p54 = scmp.eq.s32.totalorder %s14, 0
      %p55 = por %p53, %p54
      %p56 = scmp.ne.s32.totalorder %s45, %s48
      %p57 = scmp.eq.s32.totalorder %s19, 3
      %p58 = por %p56, %p57
      %p59 = scmp.ne.s32.totalorder %s48, %s49
      %p60 = scmp.eq.s32.totalorder %s19, 0
      %p61 = por %p59, %p60
      %p62 = scmp.ne.s32.totalorder %s48, %s49
      %p63 = scmp.eq.s32.totalorder %s20, 3
      %p64 = por %p62, %p63
      %p66 = scmp.ne.s32.totalorder %s49, %s65
      %p67 = scmp.eq.s32.totalorder %s20, 0
      %p68 = por %p66, %p67
      %s69 = ssub.s32 %s22, %s36
      %s70 = ssub.s32 %s23, %s32
      %s71 = sor.u32 %s69, %s70
      %p72 = scmp.eq.s32.totalorder %s71, 0
      %s74 = sadd.s32 %s73, 1
      %s75 = scalar_select %p72, %s73, %s74
      %p78 = pneg %p72
      %p79 = scmp.eq.s32.totalorder %s14, 3
      %p80 = por %p78, %p79
      %p81 = scmp.ne.s32.totalorder %s73, %s76
      %p82 = scmp.eq.s32.totalorder %s14, 0
      %p83 = por %p81, %p82
      %p84 = scmp.ne.s32.totalorder %s73, %s76
      %p85 = scmp.eq.s32.totalorder %s19, 3
      %p86 = por %p84, %p85
      %p87 = scmp.ne.s32.totalorder %s76, %s77
      %p88 = scmp.eq.s32.totalorder %s19, 0
      %p89 = por %p87, %p88
      %p90 = scmp.ne.s32.totalorder %s76, %s77
      %p91 = scmp.eq.s32.totalorder %s20, 3
      %p92 = por %p90, %p91
      %p94 = scmp.ne.s32.totalorder %s77, %s93
      %p95 = scmp.eq.s32.totalorder %s20, 0
      %p96 = por %p94, %p95
      %s97 = ssub.s32 %s21, %s40
      %p98 = scmp.eq.s32.totalorder %s97, 0
      %s100 = sadd.s32 %s99, 1
      %s101 = scalar_select %p98, %s99, %s100
      %p104 = pneg %p98
      %p105 = scmp.eq.s32.totalorder %s14, 3
      %p106 = por %p104, %p105
      %p107 = scmp.ne.s32.totalorder %s99, %s102
      %p108 = scmp.eq.s32.totalorder %s14, 0
      %p109 = por %p107, %p108
      %p110 = scmp.ne.s32.totalorder %s99, %s102
      %p111 = scmp.eq.s32.totalorder %s19, 3
      %p112 = por %p110, %p111
      %p113 = scmp.ne.s32.totalorder %s102, %s103
      %p114 = scmp.eq.s32.totalorder %s19, 0
      %p115 = por %p113, %p114
      %p116 = scmp.ne.s32.totalorder %s102, %s103
      %p117 = scmp.eq.s32.totalorder %s20, 3
      %p118 = por %p116, %p117
      %p120 = scmp.ne.s32.totalorder %s103, %s119
      %p121 = scmp.eq.s32.totalorder %s20, 0
      %p122 = por %p120, %p121
      %s123 = ssub.s32 %s21, %s40
      %p124 = scmp.eq.s32.totalorder %s123, 0
      %s126 = sadd.s32 %s125, 1
      %s127 = scalar_select %p124, %s125, %s126
      %p130 = pneg %p124
      %p131 = scmp.eq.s32.totalorder %s14, 3
      %p132 = por %p130, %p131
      %p133 = scmp.ne.s32.totalorder %s125, %s128
      %p134 = scmp.eq.s32.totalorder %s14, 0
      %p135 = por %p133, %p134
      %p136 = scmp.ne.s32.totalorder %s125, %s128
      %p137 = scmp.eq.s32.totalorder %s19, 3
      %p138 = por %p136, %p137
      %p139 = scmp.ne.s32.totalorder %s128, %s129
      %p140 = scmp.eq.s32.totalorder %s19, 0
      %p141 = por %p139, %p140
      %p142 = scmp.ne.s32.totalorder %s128, %s129
      %p143 = scmp.eq.s32.totalorder %s20, 3
      %p144 = por %p142, %p143
      %p146 = scmp.ne.s32.totalorder %s129, %s145
      %p147 = scmp.eq.s32.totalorder %s20, 0
      %p148 = por %p146, %p147
      %s149 = ssub.s32 %s21, %s40
      %p150 = scmp.eq.s32.totalorder %s149, 0
      %s152 = sadd.s32 %s151, 1
      %s153 = scalar_select %p150, %s151, %s152
      %p156 = pneg %p150
      %p157 = scmp.eq.s32.totalorder %s14, 3
      %p158 = por %p156, %p157
      %p159 = scmp.ne.s32.totalorder %s151, %s154
      %p160 = scmp.eq.s32.totalorder %s14, 0
      %p161 = por %p159, %p160
      %p162 = scmp.ne.s32.totalorder %s151, %s154
      %p163 = scmp.eq.s32.totalorder %s19, 3
      %p164 = por %p162, %p163
      %p165 = scmp.ne.s32.totalorder %s154, %s155
      %p166 = scmp.eq.s32.totalorder %s19, 0
      %p167 = por %p165, %p166
      %p168 = scmp.ne.s32.totalorder %s154, %s155
      %p169 = scmp.eq.s32.totalorder %s20, 3
      %p170 = por %p168, %p169
      %p172 = scmp.ne.s32.totalorder %s155, %s171
      %p173 = scmp.eq.s32.totalorder %s20, 0
      %p174 = por %p172, %p173
      %s175 = ssub.s32 %s22, %s36
      %s176 = ssub.s32 %s23, %s32
      %s177 = sor.u32 %s175, %s176
      %s178 = ssub.s32 %s21, %s40
      %s179 = sor.u32 %s177, %s178
      %p180 = scmp.eq.s32.totalorder %s179, 0
      %s182 = sadd.s32 %s181, 1
      %s183 = scalar_select %p180, %s181, %s182
      %p186 = pneg %p180
      %p187 = scmp.eq.s32.totalorder %s14, 3
      %p188 = por %p186, %p187
      %p189 = scmp.ne.s32.totalorder %s181, %s184
      %p190 = scmp.eq.s32.totalorder %s14, 0
      %p191 = por %p189, %p190
      %p192 = scmp.ne.s32.totalorder %s181, %s184
      %p193 = scmp.eq.s32.totalorder %s19, 3
      %p194 = por %p192, %p193
      %p195 = scmp.ne.s32.totalorder %s184, %s185
      %p196 = scmp.eq.s32.totalorder %s19, 0
      %p197 = por %p195, %p196
      %p198 = scmp.ne.s32.totalorder %s184, %s185
      %p199 = scmp.eq.s32.totalorder %s20, 3
      %p200 = por %p198, %p199
      %p202 = scmp.ne.s32.totalorder %s185, %s201
      %p203 = scmp.eq.s32.totalorder %s20, 0
      %p204 = por %p202, %p203
      %p205 = scmp.le.s32.totalorder 1, %s14
      %p206 = scmp.lt.s32.totalorder %s14, 5
      %p207 = pnand %p205, %p206
      %p208 = pneg %p207
      // Predicated region
      $region9: #{tpu_custom_call.1} parent=5 // pred_check
        _
      $region10: #{tpu_custom_call.1} parent=5 // pred_check_branch
        %210 = sbr.rel (%p207) target = $region12
      $region11: #{tpu_custom_call.1} parent=5 // pred_region
        %s211 = ssub.s32 %s14, 1
        // Predicated region
        $region13: #{tpu_custom_call.1} parent=11 // pred_check
          %p212 = pneg %p115
        $region14: #{tpu_custom_call.1} parent=11 // pred_check_branch
          %214 = sbr.rel (%p212) target = $region16
        $region15: #{tpu_custom_call.1} parent=11 // pred_region
          %p215 = scmp.lt.s32.totalorder %s24, 0
          %s216 = scalar_select %p215, %s24, 0
          %s217 = smul.addr %s216, 2
          %s218 = scalar_lea.vmem %s2, %s217
        $region16: #{tpu_custom_call.1} parent=11 // pred_fallthru
          _
        // Predicated region
        $region17: #{tpu_custom_call.1} parent=11 // pred_check
          %p219 = pneg %p141
        $region18: #{tpu_custom_call.1} parent=11 // pred_check_branch
          %221 = sbr.rel (%p219) target = $region20
        $region19: #{tpu_custom_call.1} parent=11 // pred_region
          %p222 = scmp.lt.s32.totalorder %s24, 0
          %s223 = scalar_select %p222, %s24, 0
          %s224 = scalar_lea.vmem %s3, %s223
        $region20: #{tpu_custom_call.1} parent=11 // pred_fallthru
          _
        // Predicated region
        $region21: #{tpu_custom_call.1} parent=11 // pred_check
          %p225 = pneg %p167
        $region22: #{tpu_custom_call.1} parent=11 // pred_check_branch
          %227 = sbr.rel (%p225) target = $region24
        $region23: #{tpu_custom_call.1} parent=11 // pred_region
          %p228 = scmp.lt.s32.totalorder %s24, 0
          %s229 = scalar_select %p228, %s24, 0
          %s230 = scalar_lea.vmem %s4, %s229
        $region24: #{tpu_custom_call.1} parent=11 // pred_fallthru
          _
      $region12: #{tpu_custom_call.1} parent=5 // pred_fallthru
        _
      %p231 = scmp.lt.s32.totalorder %s14, 4
      // Predicated region
      $region25: #{tpu_custom_call.1} parent=5 // pred_check
        %p232 = pneg %p231
      $region26: #{tpu_custom_call.1} parent=5 // pred_check_branch
        %234 = sbr.rel (%p232) target = $region28
      $region27: #{tpu_custom_call.1} parent=5 // pred_region
        // Predicated region
        $region29: #{tpu_custom_call.1} parent=27 // pred_check
          %p235 = pneg %p55
        $region30: #{tpu_custom_call.1} parent=27 // pred_check_branch
          %237 = sbr.rel (%p235) target = $region32
        $region31: #{tpu_custom_call.1} parent=27 // pred_region
          %s238 = smul.u32 8, %s23
          %s239 = ssub.s32 18, %s238
          %p240 = scmp.lt.s32.totalorder %s239, 8
          %s241 = scalar_select %p240, %s239, 8
          %s242 = smul.u32 64, %s241
          %s243 = smul.u32 %s242, 3
          %p244 = scmp.lt.s32.totalorder %s22, 1
          %s245 = scalar_select %p244, %s22, 1
          %p246 = scmp.lt.s32.totalorder %s238, 17
          %s247 = scalar_select %p246, %s238, 17
          %s248 = smul.addr %s247, 3
          %s249 = smul.addr %s245, 54
          %s250 = sadd.s32 %s248, %s249
          %s251 = smul.addr %s250, 4
          %s252 = scalar_lea.vmem %s0, %s251
          %s253 = smul.u32 8, %s23
          %s254 = ssub.s32 18, %s253
          %p255 = scmp.lt.s32.totalorder %s254, 8
          %s256 = scalar_select %p255, %s254, 8
          %s257 = smul.u32 64, %s256
          %s258 = smul.u32 %s257, 3
        $region32: #{tpu_custom_call.1} parent=27 // pred_fallthru
          _
        // Predicated region
        $region33: #{tpu_custom_call.1} parent=27 // pred_check
          %p259 = pneg %p83
        $region34: #{tpu_custom_call.1} parent=27 // pred_check_branch
          %261 = sbr.rel (%p259) target = $region36
        $region35: #{tpu_custom_call.1} parent=27 // pred_region
          %p262 = scmp.lt.s32.totalorder %s22, 1
          %s263 = scalar_select %p262, %s22, 1
          %p264 = scmp.lt.s32.totalorder %s23, 1
          %s265 = scalar_select %p264, %s23, 1
          %s266 = smul.addr %s265, 6
          %s267 = smul.addr %s263, 12
          %s268 = sadd.s32 %s266, %s267
          %s269 = smul.addr %s268, 4
          %s270 = scalar_lea.vmem %s1, %s269
        $region36: #{tpu_custom_call.1} parent=27 // pred_fallthru
          _
      $region28: #{tpu_custom_call.1} parent=5 // pred_fallthru
        _
      %p271 = scmp.le.s32.totalorder 1, %s14
      %p272 = scmp.lt.s32.totalorder %s14, 5
      %p273 = pnand %p271, %p272
      %p274 = pneg %p273
      // Predicated region
      $region37: #{tpu_custom_call.1} parent=5 // pred_check
        _
      $region38: #{tpu_custom_call.1} parent=5 // pred_check_branch
        %276 = sbr.rel (%p273) target = $region40
      $region39: #{tpu_custom_call.1} parent=5 // pred_region
        %s277 = ssub.s32 %s14, 1
        %s278 = smul.u32 8, %s26
        %s279 = ssub.s32 18, %s278
        %p280 = scmp.lt.s32.totalorder %s279, 8
        %s281 = scalar_select %p280, %s279, 8
        %s282 = smul.u32 64, %s281
        %s283 = smul.u32 %s282, 3
        %p284 = scmp.lt.s32.totalorder %s25, 1
        %s285 = scalar_select %p284, %s25, 1
        %p286 = scmp.lt.s32.totalorder %s278, 17
        %s287 = scalar_select %p286, %s278, 17
        %s288 = smul.addr %s287, 3
        %s289 = smul.addr %s285, 54
        %s290 = sadd.s32 %s288, %s289
        %s291 = smul.addr %s290, 4
        %s292 = scalar_lea.vmem %s0, %s291
        %p293 = pneg %p61
        %p294 = pneg %p58
        %p295 = scmp.lt.s32.totalorder %s25, 1
        %s296 = scalar_select %p295, %s25, 1
        %p297 = scmp.lt.s32.totalorder %s26, 1
        %s298 = scalar_select %p297, %s26, 1
        %s299 = smul.addr %s298, 6
        %s300 = smul.addr %s296, 12
        %s301 = sadd.s32 %s299, %s300
        %s302 = smul.addr %s301, 4
        %s303 = scalar_lea.vmem %s1, %s302
        %p304 = pneg %p89
        %p305 = pneg %p86
        %p306 = scmp.lt.s32.totalorder %s24, 0
        %s307 = scalar_select %p306, %s24, 0
        %s308 = smul.addr %s307, 2
        %s309 = scalar_lea.vmem %s2, %s308
        %p310 = pneg %p115
        %p311 = pneg %p112
        %p312 = scmp.lt.s32.totalorder %s24, 0
        %s313 = scalar_select %p312, %s24, 0
        %s314 = scalar_lea.vmem %s3, %s313
        %p315 = pneg %p141
        %p316 = pneg %p138
        %p317 = scmp.lt.s32.totalorder %s24, 0
        %s318 = scalar_select %p317, %s24, 0
        %s319 = scalar_lea.vmem %s4, %s318
        %p320 = pneg %p167
        %p321 = pneg %p164
        %p322 = pneg %p197
        %p323 = pneg %p194
        %s324 = sand.u32 %s184, 1
        %s325 = scalar_lea.sflag [#allocation4], %s324
        %s326 = sand.u32 %s184, 1
        %s327 = smul.addr %s326, 128
        %s328 = scalar_lea.vmem [#allocation3], %s327
        %s329 = smul.u32 8, %s26
        %s330 = ssub.s32 18, %s329
        %p331 = scmp.lt.s32.totalorder %s330, 8
        %s332 = scalar_select %p331, %s330, 8
        %s333 = smul.u32 64, %s332
        %s334 = smul.u32 %s333, 3
        %p335 = scmp.lt.s32.totalorder %s25, 1
        %s336 = scalar_select %p335, %s25, 1
        %p337 = scmp.lt.s32.totalorder %s329, 17
        %s338 = scalar_select %p337, %s329, 17
        %s339 = smul.addr %s338, 3
        %s340 = smul.addr %s336, 54
        %s341 = sadd.s32 %s339, %s340
        %s342 = smul.addr %s341, 4
        %s343 = scalar_lea.vmem %s0, %s342
        %s344 = smul.u32 8, %s26
        %s345 = ssub.s32 18, %s344
        %p346 = scmp.lt.s32.totalorder %s345, 8
        %s347 = scalar_select %p346, %s345, 8
        %s348 = smul.u32 64, %s347
        %s349 = smul.u32 %s348, 3
        %p350 = scmp.lt.s32.totalorder %s25, 1
        %s351 = scalar_select %p350, %s25, 1
        %p352 = scmp.lt.s32.totalorder %s26, 1
        %s353 = scalar_select %p352, %s26, 1
        %s354 = smul.addr %s353, 6
        %s355 = smul.addr %s351, 12
        %s356 = sadd.s32 %s354, %s355
        %s357 = smul.addr %s356, 4
        %s358 = scalar_lea.vmem %s1, %s357
        %p359 = scmp.lt.s32.totalorder %s24, 0
        %s360 = scalar_select %p359, %s24, 0
        %s361 = smul.addr %s360, 2
        %s362 = scalar_lea.vmem %s2, %s361
        %p363 = scmp.lt.s32.totalorder %s24, 0
        %s364 = scalar_select %p363, %s24, 0
        %s365 = scalar_lea.vmem %s3, %s364
        %p366 = scmp.lt.s32.totalorder %s24, 0
        %s367 = scalar_select %p366, %s24, 0
        %s368 = scalar_lea.vmem %s4, %s367
        %s369 = smul.u32 8, %s26
        %v371 = vld [vmem:[%s343] sm:$0xf]
        %v372 = vld [vmem:[%s343 + $0x4] sm:$0xf]
        %v373 = vld [vmem:[%s343 + $0xc] sm:$0xf]
        %v374 = vld [vmem:[%s343 + $0x10] sm:$0xf]
        %v375 = vld [vmem:[%s343 + $0x18] sm:$0xf]
        %v376 = vld [vmem:[%s343 + $0x1c] sm:$0xf]
        %v377 = vld [vmem:[%s343 + $0x24] sm:$0xf]
        %v378 = vld [vmem:[%s343 + $0x28] sm:$0xf]
        %v379 = vld [vmem:[%s343 + $0x30] sm:$0xf]
        %v380 = vld [vmem:[%s343 + $0x34] sm:$0xf]
        %v381 = vld [vmem:[%s343 + $0x3c] sm:$0xf]
        %v382 = vld [vmem:[%s343 + $0x40] sm:$0xf]
        %v383 = vld [vmem:[%s343 + $0x48] sm:$0xf]
        %v384 = vld [vmem:[%s343 + $0x4c] sm:$0xf]
        %v385 = vld [vmem:[%s343 + $0x54] sm:$0xf]
        %v386 = vld [vmem:[%s343 + $0x58] sm:$0xf]
        %vm387 = vcmask 27648
        %388 = vst.msk [vmem:[#allocation2] sm:$0xf] %vm387, %v371
        %389 = vst.msk [vmem:[#allocation2 + $0x4] sm:$0xf] %vm387, %v372
        %390 = vst.msk [vmem:[#allocation2 + $0x8] sm:$0xf] %vm387, %v373
        %391 = vst.msk [vmem:[#allocation2 + $0xc] sm:$0xf] %vm387, %v374
        %392 = vst.msk [vmem:[#allocation2 + $0x10] sm:$0xf] %vm387, %v375
        %393 = vst.msk [vmem:[#allocation2 + $0x14] sm:$0xf] %vm387, %v376
        %394 = vst.msk [vmem:[#allocation2 + $0x18] sm:$0xf] %vm387, %v377
        %395 = vst.msk [vmem:[#allocation2 + $0x1c] sm:$0xf] %vm387, %v378
        %396 = vst.msk [vmem:[#allocation2 + $0x20] sm:$0xf] %vm387, %v379
        %397 = vst.msk [vmem:[#allocation2 + $0x24] sm:$0xf] %vm387, %v380
        %398 = vst.msk [vmem:[#allocation2 + $0x28] sm:$0xf] %vm387, %v381
        %399 = vst.msk [vmem:[#allocation2 + $0x2c] sm:$0xf] %vm387, %v382
        %400 = vst.msk [vmem:[#allocation2 + $0x30] sm:$0xf] %vm387, %v383
        %401 = vst.msk [vmem:[#allocation2 + $0x34] sm:$0xf] %vm387, %v384
        %402 = vst.msk [vmem:[#allocation2 + $0x38] sm:$0xf] %vm387, %v385
        %403 = vst.msk [vmem:[#allocation2 + $0x3c] sm:$0xf] %vm387, %v386
        %v404 = vld [vmem:[%s358] sm:$0xf]
        %v405 = vld [vmem:[%s358 + $0x4] sm:$0xf]
        %v406 = vld [vmem:[%s358 + $0xc] sm:$0xf]
        %v407 = vld [vmem:[%s358 + $0x10] sm:$0xf]
        %s408 = scalar_lea.vmem [#allocation2], 64
        %409 = vst.msk [vmem:[%s408] sm:$0xf] %vm387, %v404
        %410 = vst.msk [vmem:[%s408 + $0x4] sm:$0xf] %vm387, %v405
        %411 = vst.msk [vmem:[%s408 + $0x8] sm:$0xf] %vm387, %v406
        %412 = vst.msk [vmem:[%s408 + $0xc] sm:$0xf] %vm387, %v407
        %v413 = vld [vmem:[%s343] sm:$0xf]
        %v414 = vld [vmem:[%s343 + $0x4] sm:$0xf]
        %v415 = vld [vmem:[%s343 + $0x8] sm:$0x1]
        %v416 = vld [vmem:[%s343 + $0xc] sm:$0xf]
        %v417 = vld [vmem:[%s343 + $0x10] sm:$0xf]
        %v418 = vld [vmem:[%s343 + $0x14] sm:$0x1]
        %v419 = vld [vmem:[%s343 + $0x18] sm:$0xf]
        %v420 = vld [vmem:[%s343 + $0x1c] sm:$0xf]
        %v421 = vld [vmem:[%s343 + $0x20] sm:$0x1]
        %v422 = vld [vmem:[%s343 + $0x24] sm:$0xf]
        %v423 = vld [vmem:[%s343 + $0x28] sm:$0xf]
        %v424 = vld [vmem:[%s343 + $0x2c] sm:$0x1]
        %v425 = vld [vmem:[%s343 + $0x30] sm:$0xf]
        %v426 = vld [vmem:[%s343 + $0x34] sm:$0xf]
        %v427 = vld [vmem:[%s343 + $0x38] sm:$0x1]
        %v428 = vld [vmem:[%s343 + $0x3c] sm:$0xf]
        %v429 = vld [vmem:[%s343 + $0x40] sm:$0xf]
        %v430 = vld [vmem:[%s343 + $0x44] sm:$0x1]
        %v431 = vld [vmem:[%s343 + $0x48] sm:$0xf]
        %v432 = vld [vmem:[%s343 + $0x4c] sm:$0xf]
        %v433 = vld [vmem:[%s343 + $0x50] sm:$0x1]
        %v434 = vld [vmem:[%s343 + $0x54] sm:$0xf]
        %v435 = vld [vmem:[%s343 + $0x58] sm:$0xf]
        %v436 = vld [vmem:[%s343 + $0x5c] sm:$0x1]
        %vm437 = vsmask.f32 3328
        %vm438 = vsmask.f32 7440
        %vm439 = vmor %vm437, %vm438
        %v441 = vshrl.u32 %v413, 16
        %v443 = vrot.slane %v441, 4
        %v444 = vshll.u32 %v413, 16
        %v446 = vrot.slane %v444, 5
        %v447 = vor.u32 %v443, %v446
        %v448 = vrot.slane %v447, 4
        %v450 = vshll.u32 %v414, 16
        %v452 = vrot.slane %v450, 5
        %v453 = vsel %vm439, %v448, %v452
        %v454 = vshrl.u32 %v414, 16
        %v456 = vrot.slane %v454, 4
        %v457 = vor.u32 %v456, %v452
        %v458 = vrot.slane %v457, 4
        %v460 = vshll.u32 %v415, 16
        %v462 = vrot.slane %v460, 5
        %v463 = vsel %vm439, %v458, %v462
        %v465 = vshrl.u32 %v416, 16
        %v467 = vrot.slane %v465, 4
        %v468 = vshll.u32 %v416, 16
        %v470 = vrot.slane %v468, 5
        %v471 = vor.u32 %v467, %v470
        %v472 = vrot.slane %v471, 4
        %v474 = vshll.u32 %v417, 16
        %v476 = vrot.slane %v474, 5
        %v477 = vsel %vm439, %v472, %v476
        %v478 = vshrl.u32 %v417, 16
        %v480 = vrot.slane %v478, 4
        %v481 = vor.u32 %v480, %v476
        %v482 = vrot.slane %v481, 4
        %v484 = vshll.u32 %v418, 16
        %v486 = vrot.slane %v484, 5
        %v487 = vsel %vm439, %v482, %v486
        %v489 = vshrl.u32 %v419, 16
        %v491 = vrot.slane %v489, 4
        %v492 = vshll.u32 %v419, 16
        %v494 = vrot.slane %v492, 5
        %v495 = vor.u32 %v491, %v494
        %v496 = vrot.slane %v495, 4
        %v498 = vshll.u32 %v420, 16
        %v500 = vrot.slane %v498, 5
        %v501 = vsel %vm439, %v496, %v500
        %v502 = vshrl.u32 %v420, 16
        %v504 = vrot.slane %v502, 4
        %v505 = vor.u32 %v504, %v500
        %v506 = vrot.slane %v505, 4
        %v508 = vshll.u32 %v421, 16
        %v510 = vrot.slane %v508, 5
        %v511 = vsel %vm439, %v506, %v510
        %v513 = vshrl.u32 %v422, 16
        %v515 = vrot.slane %v513, 4
        %v516 = vshll.u32 %v422, 16
        %v518 = vrot.slane %v516, 5
        %v519 = vor.u32 %v515, %v518
        %v520 = vrot.slane %v519, 4
        %v522 = vshll.u32 %v423, 16
        %v524 = vrot.slane %v522, 5
        %v525 = vsel %vm439, %v520, %v524
        %v526 = vshrl.u32 %v423, 16
        %v528 = vrot.slane %v526, 4
        %v529 = vor.u32 %v528, %v524
        %v530 = vrot.slane %v529, 4
        %v532 = vshll.u32 %v424, 16
        %v534 = vrot.slane %v532, 5
        %v535 = vsel %vm439, %v530, %v534
        %v537 = vshrl.u32 %v425, 16
        %v539 = vrot.slane %v537, 4
        %v540 = vshll.u32 %v425, 16
        %v542 = vrot.slane %v540, 5
        %v543 = vor.u32 %v539, %v542
        %v544 = vrot.slane %v543, 4
        %v546 = vshll.u32 %v426, 16
        %v548 = vrot.slane %v546, 5
        %v549 = vsel %vm439, %v544, %v548
        %v550 = vshrl.u32 %v426, 16
        %v552 = vrot.slane %v550, 4
        %v553 = vor.u32 %v552, %v548
        %v554 = vrot.slane %v553, 4
        %v556 = vshll.u32 %v427, 16
        %v558 = vrot.slane %v556, 5
        %v559 = vsel %vm439, %v554, %v558
        %v561 = vshrl.u32 %v428, 16
        %v563 = vrot.slane %v561, 4
        %v564 = vshll.u32 %v428, 16
        %v566 = vrot.slane %v564, 5
        %v567 = vor.u32 %v563, %v566
        %v568 = vrot.slane %v567, 4
        %v570 = vshll.u32 %v429, 16
        %v572 = vrot.slane %v570, 5
        %v573 = vsel %vm439, %v568, %v572
        %v574 = vshrl.u32 %v429, 16
        %v576 = vrot.slane %v574, 4
        %v577 = vor.u32 %v576, %v572
        %v578 = vrot.slane %v577, 4
        %v580 = vshll.u32 %v430, 16
        %v582 = vrot.slane %v580, 5
        %v583 = vsel %vm439, %v578, %v582
        %v585 = vshrl.u32 %v431, 16
        %v587 = vrot.slane %v585, 4
        %v588 = vshll.u32 %v431, 16
        %v590 = vrot.slane %v588, 5
        %v591 = vor.u32 %v587, %v590
        %v592 = vrot.slane %v591, 4
        %v594 = vshll.u32 %v432, 16
        %v596 = vrot.slane %v594, 5
        %v597 = vsel %vm439, %v592, %v596
        %v598 = vshrl.u32 %v432, 16
        %v600 = vrot.slane %v598, 4
        %v601 = vor.u32 %v600, %v596
        %v602 = vrot.slane %v601, 4
        %v604 = vshll.u32 %v433, 16
        %v606 = vrot.slane %v604, 5
        %v607 = vsel %vm439, %v602, %v606
        %v609 = vshrl.u32 %v434, 16
        %v611 = vrot.slane %v609, 4
        %v612 = vshll.u32 %v434, 16
        %v614 = vrot.slane %v612, 5
        %v615 = vor.u32 %v611, %v614
        %v616 = vrot.slane %v615, 4
        %v618 = vshll.u32 %v435, 16
        %v620 = vrot.slane %v618, 5
        %v621 = vsel %vm439, %v616, %v620
        %v622 = vshrl.u32 %v435, 16
        %v624 = vrot.slane %v622, 4
        %v625 = vor.u32 %v624, %v620
        %v626 = vrot.slane %v625, 4
        %v628 = vshll.u32 %v436, 16
        %v630 = vrot.slane %v628, 5
        %v631 = vsel %vm439, %v626, %v630
        %s648 = scalar_lea.vmem [#allocation2], 80
        %649 = vst.msk [vmem:[%s648] sm:$0xf] %vm387, %v453
        %650 = vst.msk [vmem:[%s648 + $0x4] sm:$0xf] %vm387, %v463
        %651 = vst.msk [vmem:[%s648 + $0x8] sm:$0xf] %vm387, %v477
        %652 = vst.msk [vmem:[%s648 + $0xc] sm:$0xf] %vm387, %v487
        %653 = vst.msk [vmem:[%s648 + $0x10] sm:$0xf] %vm387, %v501
        %654 = vst.msk [vmem:[%s648 + $0x14] sm:$0xf] %vm387, %v511
        %655 = vst.msk [vmem:[%s648 + $0x18] sm:$0xf] %vm387, %v525
        %656 = vst.msk [vmem:[%s648 + $0x1c] sm:$0xf] %vm387, %v535
        %657 = vst.msk [vmem:[%s648 + $0x20] sm:$0xf] %vm387, %v549
        %658 = vst.msk [vmem:[%s648 + $0x24] sm:$0xf] %vm387, %v559
        %659 = vst.msk [vmem:[%s648 + $0x28] sm:$0xf] %vm387, %v573
        %660 = vst.msk [vmem:[%s648 + $0x2c] sm:$0xf] %vm387, %v583
        %661 = vst.msk [vmem:[%s648 + $0x30] sm:$0xf] %vm387, %v597
        %662 = vst.msk [vmem:[%s648 + $0x34] sm:$0xf] %vm387, %v607
        %663 = vst.msk [vmem:[%s648 + $0x38] sm:$0xf] %vm387, %v621
        %664 = vst.msk [vmem:[%s648 + $0x3c] sm:$0xf] %vm387, %v631
        %v665 = vld [vmem:[%s358] sm:$0xf]
        %v666 = vld [vmem:[%s358 + $0x4] sm:$0xf]
        %v667 = vld [vmem:[%s358 + $0x8] sm:$0x1]
        %v668 = vld [vmem:[%s358 + $0xc] sm:$0xf]
        %v669 = vld [vmem:[%s358 + $0x10] sm:$0xf]
        %v670 = vld [vmem:[%s358 + $0x14] sm:$0x1]
        %v672 = vshrl.u32 %v665, 16
        %v674 = vrot.slane %v672, 4
        %v675 = vshll.u32 %v665, 16
        %v677 = vrot.slane %v675, 5
        %v678 = vor.u32 %v674, %v677
        %v679 = vrot.slane %v678, 4
        %v681 = vshll.u32 %v666, 16
        %v683 = vrot.slane %v681, 5
        %v684 = vsel %vm439, %v679, %v683
        %v685 = vshrl.u32 %v666, 16
        %v687 = vrot.slane %v685, 4
        %v688 = vor.u32 %v687, %v683
        %v689 = vrot.slane %v688, 4
        %v691 = vshll.u32 %v667, 16
        %v693 = vrot.slane %v691, 5
        %v694 = vsel %vm439, %v689, %v693
        %v696 = vshrl.u32 %v668, 16
        %v698 = vrot.slane %v696, 4
        %v699 = vshll.u32 %v668, 16
        %v701 = vrot.slane %v699, 5
        %v702 = vor.u32 %v698, %v701
        %v703 = vrot.slane %v702, 4
        %v705 = vshll.u32 %v669, 16
        %v707 = vrot.slane %v705, 5
        %v708 = vsel %vm439, %v703, %v707
        %v709 = vshrl.u32 %v669, 16
        %v711 = vrot.slane %v709, 4
        %v712 = vor.u32 %v711, %v707
        %v713 = vrot.slane %v712, 4
        %v715 = vshll.u32 %v670, 16
        %v717 = vrot.slane %v715, 5
        %v718 = vsel %vm439, %v713, %v717
        %s723 = scalar_lea.vmem [#allocation2], 144
        %724 = vst.msk [vmem:[%s723] sm:$0xf] %vm387, %v684
        %725 = vst.msk [vmem:[%s723 + $0x4] sm:$0xf] %vm387, %v694
        %726 = vst.msk [vmem:[%s723 + $0x8] sm:$0xf] %vm387, %v708
        %727 = vst.msk [vmem:[%s723 + $0xc] sm:$0xf] %vm387, %v718
        %v728 = vld [vmem:[%s343] sm:$0xe]
        %v729 = vld [vmem:[%s343 + $0x4] sm:$0xf]
        %v730 = vld [vmem:[%s343 + $0x8] sm:$0x1]
        %v731 = vld [vmem:[%s343 + $0xc] sm:$0xe]
        %v732 = vld [vmem:[%s343 + $0x10] sm:$0xf]
        %v733 = vld [vmem:[%s343 + $0x14] sm:$0x1]
        %v734 = vld [vmem:[%s343 + $0x18] sm:$0xe]
        %v735 = vld [vmem:[%s343 + $0x1c] sm:$0xf]
        %v736 = vld [vmem:[%s343 + $0x20] sm:$0x1]
        %v737 = vld [vmem:[%s343 + $0x24] sm:$0xe]
        %v738 = vld [vmem:[%s343 + $0x28] sm:$0xf]
        %v739 = vld [vmem:[%s343 + $0x2c] sm:$0x1]
        %v740 = vld [vmem:[%s343 + $0x30] sm:$0xe]
        %v741 = vld [vmem:[%s343 + $0x34] sm:$0xf]
        %v742 = vld [vmem:[%s343 + $0x38] sm:$0x1]
        %v743 = vld [vmem:[%s343 + $0x3c] sm:$0xe]
        %v744 = vld [vmem:[%s343 + $0x40] sm:$0xf]
        %v745 = vld [vmem:[%s343 + $0x44] sm:$0x1]
        %v746 = vld [vmem:[%s343 + $0x48] sm:$0xe]
        %v747 = vld [vmem:[%s343 + $0x4c] sm:$0xf]
        %v748 = vld [vmem:[%s343 + $0x50] sm:$0x1]
        %v749 = vld [vmem:[%s343 + $0x54] sm:$0xe]
        %v750 = vld [vmem:[%s343 + $0x58] sm:$0xf]
        %v751 = vld [vmem:[%s343 + $0x5c] sm:$0x1]
        %vm776 = vcmask 1042432
        %vm777 = vcmask 1046532
        %vm778 = vmor %vm776, %vm777
        %v779 = vrot.slane %v728, 5
        %v780 = vrot.slane %v779, 4
        %v781 = vrot.slane %v729, 5
        %v782 = vsel %vm778, %v780, %v781
        %v783 = vrot.slane %v781, 4
        %v784 = vrot.slane %v730, 5
        %v785 = vsel %vm778, %v783, %v784
        %v786 = vrot.slane %v731, 5
        %v787 = vrot.slane %v786, 4
        %v788 = vrot.slane %v732, 5
        %v789 = vsel %vm778, %v787, %v788
        %v790 = vrot.slane %v788, 4
        %v791 = vrot.slane %v733, 5
        %v792 = vsel %vm778, %v790, %v791
        %v793 = vrot.slane %v734, 5
        %v794 = vrot.slane %v793, 4
        %v795 = vrot.slane %v735, 5
        %v796 = vsel %vm778, %v794, %v795
        %v797 = vrot.slane %v795, 4
        %v798 = vrot.slane %v736, 5
        %v799 = vsel %vm778, %v797, %v798
        %v800 = vrot.slane %v737, 5
        %v801 = vrot.slane %v800, 4
        %v802 = vrot.slane %v738, 5
        %v803 = vsel %vm778, %v801, %v802
        %v804 = vrot.slane %v802, 4
        %v805 = vrot.slane %v739, 5
        %v806 = vsel %vm778, %v804, %v805
        %v807 = vrot.slane %v740, 5
        %v808 = vrot.slane %v807, 4
        %v809 = vrot.slane %v741, 5
        %v810 = vsel %vm778, %v808, %v809
        %v811 = vrot.slane %v809, 4
        %v812 = vrot.slane %v742, 5
        %v813 = vsel %vm778, %v811, %v812
        %v814 = vrot.slane %v743, 5
        %v815 = vrot.slane %v814, 4
        %v816 = vrot.slane %v744, 5
        %v817 = vsel %vm778, %v815, %v816
        %v818 = vrot.slane %v816, 4
        %v819 = vrot.slane %v745, 5
        %v820 = vsel %vm778, %v818, %v819
        %v821 = vrot.slane %v746, 5
        %v822 = vrot.slane %v821, 4
        %v823 = vrot.slane %v747, 5
        %v824 = vsel %vm778, %v822, %v823
        %v825 = vrot.slane %v823, 4
        %v826 = vrot.slane %v748, 5
        %v827 = vsel %vm778, %v825, %v826
        %v828 = vrot.slane %v749, 5
        %v829 = vrot.slane %v828, 4
        %v830 = vrot.slane %v750, 5
        %v831 = vsel %vm778, %v829, %v830
        %v832 = vrot.slane %v830, 4
        %v833 = vrot.slane %v751, 5
        %v834 = vsel %vm778, %v832, %v833
        %s851 = scalar_lea.vmem [#allocation2], 160
        %852 = vst.msk [vmem:[%s851] sm:$0xf] %vm387, %v782
        %853 = vst.msk [vmem:[%s851 + $0x4] sm:$0xf] %vm387, %v785
        %854 = vst.msk [vmem:[%s851 + $0x8] sm:$0xf] %vm387, %v789
        %855 = vst.msk [vmem:[%s851 + $0xc] sm:$0xf] %vm387, %v792
        %856 = vst.msk [vmem:[%s851 + $0x10] sm:$0xf] %vm387, %v796
        %857 = vst.msk [vmem:[%s851 + $0x14] sm:$0xf] %vm387, %v799
        %858 = vst.msk [vmem:[%s851 + $0x18] sm:$0xf] %vm387, %v803
        %859 = vst.msk [vmem:[%s851 + $0x1c] sm:$0xf] %vm387, %v806
        %860 = vst.msk [vmem:[%s851 + $0x20] sm:$0xf] %vm387, %v810
        %861 = vst.msk [vmem:[%s851 + $0x24] sm:$0xf] %vm387, %v813
        %862 = vst.msk [vmem:[%s851 + $0x28] sm:$0xf] %vm387, %v817
        %863 = vst.msk [vmem:[%s851 + $0x2c] sm:$0xf] %vm387, %v820
        %864 = vst.msk [vmem:[%s851 + $0x30] sm:$0xf] %vm387, %v824
        %865 = vst.msk [vmem:[%s851 + $0x34] sm:$0xf] %vm387, %v827
        %866 = vst.msk [vmem:[%s851 + $0x38] sm:$0xf] %vm387, %v831
        %867 = vst.msk [vmem:[%s851 + $0x3c] sm:$0xf] %vm387, %v834
        %v868 = vld [vmem:[%s358] sm:$0xe]
        %v869 = vld [vmem:[%s358 + $0x4] sm:$0xf]
        %v870 = vld [vmem:[%s358 + $0x8] sm:$0x1]
        %v871 = vld [vmem:[%s358 + $0xc] sm:$0xe]
        %v872 = vld [vmem:[%s358 + $0x10] sm:$0xf]
        %v873 = vld [vmem:[%s358 + $0x14] sm:$0x1]
        %v880 = vrot.slane %v868, 5
        %v881 = vrot.slane %v880, 4
        %v882 = vrot.slane %v869, 5
        %v883 = vsel %vm778, %v881, %v882
        %v884 = vrot.slane %v882, 4
        %v885 = vrot.slane %v870, 5
        %v886 = vsel %vm778, %v884, %v885
        %v887 = vrot.slane %v871, 5
        %v888 = vrot.slane %v887, 4
        %v889 = vrot.slane %v872, 5
        %v890 = vsel %vm778, %v888, %v889
        %v891 = vrot.slane %v889, 4
        %v892 = vrot.slane %v873, 5
        %v893 = vsel %vm778, %v891, %v892
        %s898 = scalar_lea.vmem [#allocation2], 224
        %899 = vst.msk [vmem:[%s898] sm:$0xf] %vm387, %v883
        %900 = vst.msk [vmem:[%s898 + $0x4] sm:$0xf] %vm387, %v886
        %901 = vst.msk [vmem:[%s898 + $0x8] sm:$0xf] %vm387, %v890
        %902 = vst.msk [vmem:[%s898 + $0xc] sm:$0xf] %vm387, %v893
        %v903 = vld [vmem:[#allocation2] sm:$0xf]
        %v904 = vld [vmem:[#allocation2 + $0x4] sm:$0xf]
        %v905 = vld [vmem:[#allocation2 + $0x8] sm:$0xf]
        %v906 = vld [vmem:[#allocation2 + $0xc] sm:$0xf]
        %v907 = vld [vmem:[#allocation2 + $0x10] sm:$0xf]
        %v908 = vld [vmem:[#allocation2 + $0x14] sm:$0xf]
        %v909 = vld [vmem:[#allocation2 + $0x18] sm:$0xf]
        %v910 = vld [vmem:[#allocation2 + $0x1c] sm:$0xf]
        %v911 = vld [vmem:[#allocation2 + $0x20] sm:$0xf]
        %v912 = vld [vmem:[#allocation2 + $0x24] sm:$0xf]
        %v913 = vld [vmem:[#allocation2 + $0x28] sm:$0xf]
        %v914 = vld [vmem:[#allocation2 + $0x2c] sm:$0xf]
        %v915 = vld [vmem:[#allocation2 + $0x30] sm:$0xf]
        %v916 = vld [vmem:[#allocation2 + $0x34] sm:$0xf]
        %v917 = vld [vmem:[#allocation2 + $0x38] sm:$0xf]
        %v918 = vld [vmem:[#allocation2 + $0x3c] sm:$0xf]
        %v919 = vld [vmem:[%s362] sm:$0x3]
        %v920 = vld [vmem:[%s648] sm:$0xf]
        %v921 = vld [vmem:[%s648 + $0x4] sm:$0xf]
        %v922 = vld [vmem:[%s648 + $0x8] sm:$0xf]
        %v923 = vld [vmem:[%s648 + $0xc] sm:$0xf]
        %v924 = vld [vmem:[%s648 + $0x10] sm:$0xf]
        %v925 = vld [vmem:[%s648 + $0x14] sm:$0xf]
        %v926 = vld [vmem:[%s648 + $0x18] sm:$0xf]
        %v927 = vld [vmem:[%s648 + $0x1c] sm:$0xf]
        %v928 = vld [vmem:[%s648 + $0x20] sm:$0xf]
        %v929 = vld [vmem:[%s648 + $0x24] sm:$0xf]
        %v930 = vld [vmem:[%s648 + $0x28] sm:$0xf]
        %v931 = vld [vmem:[%s648 + $0x2c] sm:$0xf]
        %v932 = vld [vmem:[%s648 + $0x30] sm:$0xf]
        %v933 = vld [vmem:[%s648 + $0x34] sm:$0xf]
        %v934 = vld [vmem:[%s648 + $0x38] sm:$0xf]
        %v935 = vld [vmem:[%s648 + $0x3c] sm:$0xf]
        %s936 = scalar_lea.vmem %s362, 2
        %v937 = vld [vmem:[%s936] sm:$0x3]
        %v954 = vunpack.c.l.b16 %v920
        %v955 = vunpack.c.l.b16 %v921
        %v956 = vunpack.c.l.b16 %v922
        %v957 = vunpack.c.l.b16 %v923
        %v958 = vunpack.c.l.b16 %v924
        %v959 = vunpack.c.l.b16 %v925
        %v960 = vunpack.c.l.b16 %v926
        %v961 = vunpack.c.l.b16 %v927
        %v962 = vunpack.c.l.b16 %v928
        %v963 = vunpack.c.l.b16 %v929
        %v964 = vunpack.c.l.b16 %v930
        %v965 = vunpack.c.l.b16 %v931
        %v966 = vunpack.c.l.b16 %v932
        %v967 = vunpack.c.l.b16 %v933
        %v968 = vunpack.c.l.b16 %v934
        %v969 = vunpack.c.l.b16 %v935
        %v970 = vpack.c.b16 %v955, %v954
        %v971 = vpack.c.b16 %v957, %v956
        %v972 = vpack.c.b16 %v959, %v958
        %v973 = vpack.c.b16 %v961, %v960
        %v974 = vpack.c.b16 %v963, %v962
        %v975 = vpack.c.b16 %v965, %v964
        %v976 = vpack.c.b16 %v967, %v966
        %v977 = vpack.c.b16 %v969, %v968
        %vm978 = vcmask 31744
        %v980 = vsel %vm978, %v970, 0
        %v983 = vsel %vm978, %v971, 0
        %v986 = vsel %vm978, %v972, 0
        %v989 = vsel %vm978, %v973, 0
        %v992 = vsel %vm978, %v974, 0
        %v995 = vsel %vm978, %v975, 0
        %v998 = vsel %vm978, %v976, 0
        %v1001 = vsel %vm978, %v977, 0
        %vm1003 = vcmask 1041408
        %v1005 = vsel %vm1003, %v937, 0
        %1007 = vmatprep.subr.bf16.mxu0 0
        %1008 = vmatpush1.bf16.msra.mxu0 0
        %1009 = vmatprep.subr.bf16.mxu0 0
        %1010 = vmatpush1.bf16.msra.mxu0 0
        %1011 = vmatprep.subr.bf16.mxu0 0
        %1012 = vmatpush1.bf16.msra.mxu0 0
        %1013 = vmatprep.subr.bf16.mxu0 0
        %1014 = vmatpush1.bf16.msra.mxu0 0
        %1015 = vmatprep.subr.bf16.mxu0 0
        %1016 = vmatpush1.bf16.msra.mxu0 0
        %1017 = vmatprep.subr.bf16.mxu0 0
        %1018 = vmatpush1.bf16.msra.mxu0 0
        %1019 = vmatprep.subr.bf16.mxu0 0
        %1020 = vmatpush1.bf16.msra.mxu0 0
        %1021 = vmatprep.subr.bf16.mxu0 0
        %1022 = vmatpush1.bf16.msra.mxu0 %v1005
        %1023 = vmatprep.subr.bf16.mxu0 0
        %1024 = vmatpush2.bf16.msra.mxu0 0
        %1025 = vmatprep.subr.bf16.mxu0 0
        %1026 = vmatpush2.bf16.msra.mxu0 0
        %1027 = vmatprep.subr.bf16.mxu0 0
        %1028 = vmatpush2.bf16.msra.mxu0 0
        %1029 = vmatprep.subr.bf16.mxu0 0
        %1030 = vmatpush2.bf16.msra.mxu0 0
        %1031 = vmatprep.subr.bf16.mxu0 0
        %1032 = vmatpush2.bf16.msra.mxu0 0
        %1033 = vmatprep.subr.bf16.mxu0 0
        %1034 = vmatpush2.bf16.msra.mxu0 0
        %1035 = vmatprep.subr.bf16.mxu0 0
        %1036 = vmatpush2.bf16.msra.mxu0 0
        %1037 = vmatprep.subr.bf16.mxu0 0
        %1038 = vmatpush2.bf16.msra.mxu0 0
        %1039 = vmatprep.mubr.bf16.mxu0 0
        %1040 = vmatmul.mubr.bf16.gmra.mxu0 %v980
        %v1041 = vpop.f32.mrf.mxu0
        %v1042 = vadd.f32 0.0, %v1041
        %v1043 = vpop.f32.mrf.mxu0
        %v1044 = vpop.f32.mrf.mxu0
        %v1045 = vadd.f32 0.0, %v1044
        %v1046 = vpop.f32.mrf.mxu0
        %1047 = vmatprep.mubr.bf16.mxu0 0
        %1048 = vmatmul.mubr.bf16.gmra.mxu0 %v983
        %v1049 = vpop.f32.mrf.mxu0
        %v1050 = vadd.f32 0.0, %v1049
        %v1051 = vpop.f32.mrf.mxu0
        %v1052 = vpop.f32.mrf.mxu0
        %v1053 = vadd.f32 0.0, %v1052
        %v1054 = vpop.f32.mrf.mxu0
        %1055 = vmatprep.mubr.bf16.mxu0 0
        %1056 = vmatmul.mubr.bf16.gmra.mxu0 %v986
        %v1057 = vpop.f32.mrf.mxu0
        %v1058 = vadd.f32 0.0, %v1057
        %v1059 = vpop.f32.mrf.mxu0
        %v1060 = vpop.f32.mrf.mxu0
        %v1061 = vadd.f32 0.0, %v1060
        %v1062 = vpop.f32.mrf.mxu0
        %1063 = vmatprep.mubr.bf16.mxu0 0
        %1064 = vmatmul.mubr.bf16.gmra.mxu0 %v989
        %v1065 = vpop.f32.mrf.mxu0
        %v1066 = vadd.f32 0.0, %v1065
        %v1067 = vpop.f32.mrf.mxu0
        %v1068 = vpop.f32.mrf.mxu0
        %v1069 = vadd.f32 0.0, %v1068
        %v1070 = vpop.f32.mrf.mxu0
        %1071 = vmatprep.mubr.bf16.mxu0 0
        %1072 = vmatmul.mubr.bf16.gmra.mxu0 %v992
        %v1073 = vpop.f32.mrf.mxu0
        %v1074 = vadd.f32 0.0, %v1073
        %v1075 = vpop.f32.mrf.mxu0
        %v1076 = vpop.f32.mrf.mxu0
        %v1077 = vadd.f32 0.0, %v1076
        %v1078 = vpop.f32.mrf.mxu0
        %1079 = vmatprep.mubr.bf16.mxu0 0
        %1080 = vmatmul.mubr.bf16.gmra.mxu0 %v995
        %v1081 = vpop.f32.mrf.mxu0
        %v1082 = vadd.f32 0.0, %v1081
        %v1083 = vpop.f32.mrf.mxu0
        %v1084 = vpop.f32.mrf.mxu0
        %v1085 = vadd.f32 0.0, %v1084
        %v1086 = vpop.f32.mrf.mxu0
        %1087 = vmatprep.mubr.bf16.mxu0 0
        %1088 = vmatmul.mubr.bf16.gmra.mxu0 %v998
        %v1089 = vpop.f32.mrf.mxu0
        %v1090 = vadd.f32 0.0, %v1089
        %v1091 = vpop.f32.mrf.mxu0
        %v1092 = vpop.f32.mrf.mxu0
        %v1093 = vadd.f32 0.0, %v1092
        %v1094 = vpop.f32.mrf.mxu0
        %1095 = vmatprep.mubr.bf16.mxu0 0
        %1096 = vmatmul.mubr.bf16.gmra.mxu0 %v1001
        %v1097 = vpop.f32.mrf.mxu0
        %v1098 = vadd.f32 0.0, %v1097
        %v1099 = vpop.f32.mrf.mxu0
        %v1100 = vpop.f32.mrf.mxu0
        %v1101 = vadd.f32 0.0, %v1100
        %v1102 = vpop.f32.mrf.mxu0
        %1103 = vdwg.mxu0
        %v1120 = vunpack.c.l.b16 %v903
        %v1121 = vunpack.c.l.b16 %v904
        %v1122 = vunpack.c.l.b16 %v905
        %v1123 = vunpack.c.l.b16 %v906
        %v1124 = vunpack.c.l.b16 %v907
        %v1125 = vunpack.c.l.b16 %v908
        %v1126 = vunpack.c.l.b16 %v909
        %v1127 = vunpack.c.l.b16 %v910
        %v1128 = vunpack.c.l.b16 %v911
        %v1129 = vunpack.c.l.b16 %v912
        %v1130 = vunpack.c.l.b16 %v913
        %v1131 = vunpack.c.l.b16 %v914
        %v1132 = vunpack.c.l.b16 %v915
        %v1133 = vunpack.c.l.b16 %v916
        %v1134 = vunpack.c.l.b16 %v917
        %v1135 = vunpack.c.l.b16 %v918
        %v1136 = vpack.c.b16 %v1121, %v1120
        %v1137 = vpack.c.b16 %v1123, %v1122
        %v1138 = vpack.c.b16 %v1125, %v1124
        %v1139 = vpack.c.b16 %v1127, %v1126
        %v1140 = vpack.c.b16 %v1129, %v1128
        %v1141 = vpack.c.b16 %v1131, %v1130
        %v1142 = vpack.c.b16 %v1133, %v1132
        %v1143 = vpack.c.b16 %v1135, %v1134
        %v1145 = vsel %vm978, %v1136, 0
        %v1148 = vsel %vm978, %v1137, 0
        %v1151 = vsel %vm978, %v1138, 0
        %v1154 = vsel %vm978, %v1139, 0
        %v1157 = vsel %vm978, %v1140, 0
        %v1160 = vsel %vm978, %v1141, 0
        %v1163 = vsel %vm978, %v1142, 0
        %v1166 = vsel %vm978, %v1143, 0
        %v1169 = vsel %vm1003, %v919, 0
        %1171 = vmatprep.subr.bf16.mxu0 0
        %1172 = vmatpush1.bf16.msra.mxu0 0
        %1173 = vmatprep.subr.bf16.mxu0 0
        %1174 = vmatpush1.bf16.msra.mxu0 0
        %1175 = vmatprep.subr.bf16.mxu0 0
        %1176 = vmatpush1.bf16.msra.mxu0 0
        %1177 = vmatprep.subr.bf16.mxu0 0
        %1178 = vmatpush1.bf16.msra.mxu0 0
        %1179 = vmatprep.subr.bf16.mxu0 0
        %1180 = vmatpush1.bf16.msra.mxu0 0
        %1181 = vmatprep.subr.bf16.mxu0 0
        %1182 = vmatpush1.bf16.msra.mxu0 0
        %1183 = vmatprep.subr.bf16.mxu0 0
        %1184 = vmatpush1.bf16.msra.mxu0 0
        %1185 = vmatprep.subr.bf16.mxu0 0
        %1186 = vmatpush1.bf16.msra.mxu0 %v1169
        %1187 = vmatprep.subr.bf16.mxu0 0
        %1188 = vmatpush2.bf16.msra.mxu0 0
        %1189 = vmatprep.subr.bf16.mxu0 0
        %1190 = vmatpush2.bf16.msra.mxu0 0
        %1191 = vmatprep.subr.bf16.mxu0 0
        %1192 = vmatpush2.bf16.msra.mxu0 0
        %1193 = vmatprep.subr.bf16.mxu0 0
        %1194 = vmatpush2.bf16.msra.mxu0 0
        %1195 = vmatprep.subr.bf16.mxu0 0
        %1196 = vmatpush2.bf16.msra.mxu0 0
        %1197 = vmatprep.subr.bf16.mxu0 0
        %1198 = vmatpush2.bf16.msra.mxu0 0
        %1199 = vmatprep.subr.bf16.mxu0 0
        %1200 = vmatpush2.bf16.msra.mxu0 0
        %1201 = vmatprep.subr.bf16.mxu0 0
        %1202 = vmatpush2.bf16.msra.mxu0 0
        %1203 = vmatprep.mubr.bf16.mxu0 0
        %1204 = vmatmul.mubr.bf16.gmra.mxu0 %v1145
        %v1205 = vpop.f32.mrf.mxu0
        %v1206 = vadd.f32 %v1042, %v1205
        %v1207 = vpop.f32.mrf.mxu0
        %v1208 = vpop.f32.mrf.mxu0
        %v1209 = vadd.f32 %v1045, %v1208
        %v1210 = vpop.f32.mrf.mxu0
        %1211 = vmatprep.mubr.bf16.mxu0 0
        %1212 = vmatmul.mubr.bf16.gmra.mxu0 %v1148
        %v1213 = vpop.f32.mrf.mxu0
        %v1214 = vadd.f32 %v1050, %v1213
        %v1215 = vpop.f32.mrf.mxu0
        %v1216 = vpop.f32.mrf.mxu0
        %v1217 = vadd.f32 %v1053, %v1216
        %v1218 = vpop.f32.mrf.mxu0
        %1219 = vmatprep.mubr.bf16.mxu0 0
        %1220 = vmatmul.mubr.bf16.gmra.mxu0 %v1151
        %v1221 = vpop.f32.mrf.mxu0
        %v1222 = vadd.f32 %v1058, %v1221
        %v1223 = vpop.f32.mrf.mxu0
        %v1224 = vpop.f32.mrf.mxu0
        %v1225 = vadd.f32 %v1061, %v1224
        %v1226 = vpop.f32.mrf.mxu0
        %1227 = vmatprep.mubr.bf16.mxu0 0
        %1228 = vmatmul.mubr.bf16.gmra.mxu0 %v1154
        %v1229 = vpop.f32.mrf.mxu0
        %v1230 = vadd.f32 %v1066, %v1229
        %v1231 = vpop.f32.mrf.mxu0
        %v1232 = vpop.f32.mrf.mxu0
        %v1233 = vadd.f32 %v1069, %v1232
        %v1234 = vpop.f32.mrf.mxu0
        %1235 = vmatprep.mubr.bf16.mxu0 0
        %1236 = vmatmul.mubr.bf16.gmra.mxu0 %v1157
        %v1237 = vpop.f32.mrf.mxu0
        %v1238 = vadd.f32 %v1074, %v1237
        %v1239 = vpop.f32.mrf.mxu0
        %v1240 = vpop.f32.mrf.mxu0
        %v1241 = vadd.f32 %v1077, %v1240
        %v1242 = vpop.f32.mrf.mxu0
        %1243 = vmatprep.mubr.bf16.mxu0 0
        %1244 = vmatmul.mubr.bf16.gmra.mxu0 %v1160
        %v1245 = vpop.f32.mrf.mxu0
        %v1246 = vadd.f32 %v1082, %v1245
        %v1247 = vpop.f32.mrf.mxu0
        %v1248 = vpop.f32.mrf.mxu0
        %v1249 = vadd.f32 %v1085, %v1248
        %v1250 = vpop.f32.mrf.mxu0
        %1251 = vmatprep.mubr.bf16.mxu0 0
        %1252 = vmatmul.mubr.bf16.gmra.mxu0 %v1163
        %v1253 = vpop.f32.mrf.mxu0
        %v1254 = vadd.f32 %v1090, %v1253
        %v1255 = vpop.f32.mrf.mxu0
        %v1256 = vpop.f32.mrf.mxu0
        %v1257 = vadd.f32 %v1093, %v1256
        %v1258 = vpop.f32.mrf.mxu0
        %1259 = vmatprep.mubr.bf16.mxu0 0
        %1260 = vmatmul.mubr.bf16.gmra.mxu0 %v1166
        %v1261 = vpop.f32.mrf.mxu0
        %v1262 = vadd.f32 %v1098, %v1261
        %v1263 = vpop.f32.mrf.mxu0
        %v1264 = vpop.f32.mrf.mxu0
        %v1265 = vadd.f32 %v1101, %v1264
        %v1266 = vpop.f32.mrf.mxu0
        %1267 = vdwg.mxu0
        %v1268 = vld [vmem:[%s851] sm:$0xf]
        %v1269 = vld [vmem:[%s851 + $0x4] sm:$0xf]
        %v1270 = vld [vmem:[%s851 + $0x8] sm:$0xf]
        %v1271 = vld [vmem:[%s851 + $0xc] sm:$0xf]
        %v1272 = vld [vmem:[%s851 + $0x10] sm:$0xf]
        %v1273 = vld [vmem:[%s851 + $0x14] sm:$0xf]
        %v1274 = vld [vmem:[%s851 + $0x18] sm:$0xf]
        %v1275 = vld [vmem:[%s851 + $0x1c] sm:$0xf]
        %v1276 = vld [vmem:[%s851 + $0x20] sm:$0xf]
        %v1277 = vld [vmem:[%s851 + $0x24] sm:$0xf]
        %v1278 = vld [vmem:[%s851 + $0x28] sm:$0xf]
        %v1279 = vld [vmem:[%s851 + $0x2c] sm:$0xf]
        %v1280 = vld [vmem:[%s851 + $0x30] sm:$0xf]
        %v1281 = vld [vmem:[%s851 + $0x34] sm:$0xf]
        %v1282 = vld [vmem:[%s851 + $0x38] sm:$0xf]
        %v1283 = vld [vmem:[%s851 + $0x3c] sm:$0xf]
        %s1284 = scalar_lea.vmem %s362, 4
        %v1285 = vld [vmem:[%s1284] sm:$0x3]
        %v1302 = vunpack.c.l.b16 %v1268
        %v1303 = vunpack.c.l.b16 %v1269
        %v1304 = vunpack.c.l.b16 %v1270
        %v1305 = vunpack.c.l.b16 %v1271
        %v1306 = vunpack.c.l.b16 %v1272
        %v1307 = vunpack.c.l.b16 %v1273
        %v1308 = vunpack.c.l.b16 %v1274
        %v1309 = vunpack.c.l.b16 %v1275
        %v1310 = vunpack.c.l.b16 %v1276
        %v1311 = vunpack.c.l.b16 %v1277
        %v1312 = vunpack.c.l.b16 %v1278
        %v1313 = vunpack.c.l.b16 %v1279
        %v1314 = vunpack.c.l.b16 %v1280
        %v1315 = vunpack.c.l.b16 %v1281
        %v1316 = vunpack.c.l.b16 %v1282
        %v1317 = vunpack.c.l.b16 %v1283
        %v1318 = vpack.c.b16 %v1303, %v1302
        %v1319 = vpack.c.b16 %v1305, %v1304
        %v1320 = vpack.c.b16 %v1307, %v1306
        %v1321 = vpack.c.b16 %v1309, %v1308
        %v1322 = vpack.c.b16 %v1311, %v1310
        %v1323 = vpack.c.b16 %v1313, %v1312
        %v1324 = vpack.c.b16 %v1315, %v1314
        %v1325 = vpack.c.b16 %v1317, %v1316
        %v1327 = vsel %vm978, %v1318, 0
        %v1330 = vsel %vm978, %v1319, 0
        %v1333 = vsel %vm978, %v1320, 0
        %v1336 = vsel %vm978, %v1321, 0
        %v1339 = vsel %vm978, %v1322, 0
        %v1342 = vsel %vm978, %v1323, 0
        %v1345 = vsel %vm978, %v1324, 0
        %v1348 = vsel %vm978, %v1325, 0
        %v1351 = vsel %vm1003, %v1285, 0
        %1353 = vmatprep.subr.bf16.mxu0 0
        %1354 = vmatpush1.bf16.msra.mxu0 0
        %1355 = vmatprep.subr.bf16.mxu0 0
        %1356 = vmatpush1.bf16.msra.mxu0 0
        %1357 = vmatprep.subr.bf16.mxu0 0
        %1358 = vmatpush1.bf16.msra.mxu0 0
        %1359 = vmatprep.subr.bf16.mxu0 0
        %1360 = vmatpush1.bf16.msra.mxu0 0
        %1361 = vmatprep.subr.bf16.mxu0 0
        %1362 = vmatpush1.bf16.msra.mxu0 0
        %1363 = vmatprep.subr.bf16.mxu0 0
        %1364 = vmatpush1.bf16.msra.mxu0 0
        %1365 = vmatprep.subr.bf16.mxu0 0
        %1366 = vmatpush1.bf16.msra.mxu0 0
        %1367 = vmatprep.subr.bf16.mxu0 0
        %1368 = vmatpush1.bf16.msra.mxu0 %v1351
        %1369 = vmatprep.subr.bf16.mxu0 0
        %1370 = vmatpush2.bf16.msra.mxu0 0
        %1371 = vmatprep.subr.bf16.mxu0 0
        %1372 = vmatpush2.bf16.msra.mxu0 0
        %1373 = vmatprep.subr.bf16.mxu0 0
        %1374 = vmatpush2.bf16.msra.mxu0 0
        %1375 = vmatprep.subr.bf16.mxu0 0
        %1376 = vmatpush2.bf16.msra.mxu0 0
        %1377 = vmatprep.subr.bf16.mxu0 0
        %1378 = vmatpush2.bf16.msra.mxu0 0
        %1379 = vmatprep.subr.bf16.mxu0 0
        %1380 = vmatpush2.bf16.msra.mxu0 0
        %1381 = vmatprep.subr.bf16.mxu0 0
        %1382 = vmatpush2.bf16.msra.mxu0 0
        %1383 = vmatprep.subr.bf16.mxu0 0
        %1384 = vmatpush2.bf16.msra.mxu0 0
        %1385 = vmatprep.mubr.bf16.mxu0 0
        %1386 = vmatmul.mubr.bf16.gmra.mxu0 %v1327
        %v1387 = vpop.f32.mrf.mxu0
        %v1388 = vadd.f32 0.0, %v1387
        %v1389 = vpop.f32.mrf.mxu0
        %v1390 = vpop.f32.mrf.mxu0
        %v1391 = vadd.f32 0.0, %v1390
        %v1392 = vpop.f32.mrf.mxu0
        %1393 = vmatprep.mubr.bf16.mxu0 0
        %1394 = vmatmul.mubr.bf16.gmra.mxu0 %v1330
        %v1395 = vpop.f32.mrf.mxu0
        %v1396 = vadd.f32 0.0, %v1395
        %v1397 = vpop.f32.mrf.mxu0
        %v1398 = vpop.f32.mrf.mxu0
        %v1399 = vadd.f32 0.0, %v1398
        %v1400 = vpop.f32.mrf.mxu0
        %1401 = vmatprep.mubr.bf16.mxu0 0
        %1402 = vmatmul.mubr.bf16.gmra.mxu0 %v1333
        %v1403 = vpop.f32.mrf.mxu0
        %v1404 = vadd.f32 0.0, %v1403
        %v1405 = vpop.f32.mrf.mxu0
        %v1406 = vpop.f32.mrf.mxu0
        %v1407 = vadd.f32 0.0, %v1406
        %v1408 = vpop.f32.mrf.mxu0
        %1409 = vmatprep.mubr.bf16.mxu0 0
        %1410 = vmatmul.mubr.bf16.gmra.mxu0 %v1336
        %v1411 = vpop.f32.mrf.mxu0
        %v1412 = vadd.f32 0.0, %v1411
        %v1413 = vpop.f32.mrf.mxu0
        %v1414 = vpop.f32.mrf.mxu0
        %v1415 = vadd.f32 0.0, %v1414
        %v1416 = vpop.f32.mrf.mxu0
        %1417 = vmatprep.mubr.bf16.mxu0 0
        %1418 = vmatmul.mubr.bf16.gmra.mxu0 %v1339
        %v1419 = vpop.f32.mrf.mxu0
        %v1420 = vadd.f32 0.0, %v1419
        %v1421 = vpop.f32.mrf.mxu0
        %v1422 = vpop.f32.mrf.mxu0
        %v1423 = vadd.f32 0.0, %v1422
        %v1424 = vpop.f32.mrf.mxu0
        %1425 = vmatprep.mubr.bf16.mxu0 0
        %1426 = vmatmul.mubr.bf16.gmra.mxu0 %v1342
        %v1427 = vpop.f32.mrf.mxu0
        %v1428 = vadd.f32 0.0, %v1427
        %v1429 = vpop.f32.mrf.mxu0
        %v1430 = vpop.f32.mrf.mxu0
        %v1431 = vadd.f32 0.0, %v1430
        %v1432 = vpop.f32.mrf.mxu0
        %1433 = vmatprep.mubr.bf16.mxu0 0
        %1434 = vmatmul.mubr.bf16.gmra.mxu0 %v1345
        %v1435 = vpop.f32.mrf.mxu0
        %v1436 = vadd.f32 0.0, %v1435
        %v1437 = vpop.f32.mrf.mxu0
        %v1438 = vpop.f32.mrf.mxu0
        %v1439 = vadd.f32 0.0, %v1438
        %v1440 = vpop.f32.mrf.mxu0
        %1441 = vmatprep.mubr.bf16.mxu0 0
        %1442 = vmatmul.mubr.bf16.gmra.mxu0 %v1348
        %v1443 = vpop.f32.mrf.mxu0
        %v1444 = vadd.f32 0.0, %v1443
        %v1445 = vpop.f32.mrf.mxu0
        %v1446 = vpop.f32.mrf.mxu0
        %v1447 = vadd.f32 0.0, %v1446
        %v1448 = vpop.f32.mrf.mxu0
        %1449 = vdwg.mxu0
        %v1450 = vadd.f32 %v1206, %v1388
        %v1451 = vadd.f32 %v1209, %v1391
        %v1452 = vadd.f32 %v1214, %v1396
        %v1453 = vadd.f32 %v1217, %v1399
        %v1454 = vadd.f32 %v1222, %v1404
        %v1455 = vadd.f32 %v1225, %v1407
        %v1456 = vadd.f32 %v1230, %v1412
        %v1457 = vadd.f32 %v1233, %v1415
        %v1458 = vadd.f32 %v1238, %v1420
        %v1459 = vadd.f32 %v1241, %v1423
        %v1460 = vadd.f32 %v1246, %v1428
        %v1461 = vadd.f32 %v1249, %v1431
        %v1462 = vadd.f32 %v1254, %v1436
        %v1463 = vadd.f32 %v1257, %v1439
        %v1464 = vadd.f32 %v1262, %v1444
        %v1465 = vadd.f32 %v1265, %v1447
        %s1466 = scalar_lea.vmem [#allocation2], 8
        %v1467 = vld [vmem:[%s1466] sm:$0xf]
        %v1468 = vld [vmem:[%s1466 + $0x4] sm:$0xf]
        %v1469 = vld [vmem:[%s1466 + $0x8] sm:$0xf]
        %v1470 = vld [vmem:[%s1466 + $0xc] sm:$0xf]
        %v1471 = vld [vmem:[%s1466 + $0x10] sm:$0xf]
        %v1472 = vld [vmem:[%s1466 + $0x14] sm:$0xf]
        %v1473 = vld [vmem:[%s1466 + $0x18] sm:$0xf]
        %v1474 = vld [vmem:[%s1466 + $0x1c] sm:$0xf]
        %v1475 = vld [vmem:[%s1466 + $0x20] sm:$0xf]
        %v1476 = vld [vmem:[%s1466 + $0x24] sm:$0xf]
        %v1477 = vld [vmem:[%s1466 + $0x28] sm:$0xf]
        %v1478 = vld [vmem:[%s1466 + $0x2c] sm:$0xf]
        %v1479 = vld [vmem:[%s1466 + $0x30] sm:$0xf]
        %v1480 = vld [vmem:[%s1466 + $0x34] sm:$0xf]
        %v1481 = vld [vmem:[%s1466 + $0x38] sm:$0xf]
        %v1482 = vld [vmem:[%s1466 + $0x3c] sm:$0xf]
        %s1483 = scalar_lea.vmem %s362, 6
        %v1484 = vld [vmem:[%s1483] sm:$0x3]
        %v1501 = vunpack.c.l.b16 %v1467
        %v1502 = vunpack.c.l.b16 %v1468
        %v1503 = vunpack.c.l.b16 %v1469
        %v1504 = vunpack.c.l.b16 %v1470
        %v1505 = vunpack.c.l.b16 %v1471
        %v1506 = vunpack.c.l.b16 %v1472
        %v1507 = vunpack.c.l.b16 %v1473
        %v1508 = vunpack.c.l.b16 %v1474
        %v1509 = vunpack.c.l.b16 %v1475
        %v1510 = vunpack.c.l.b16 %v1476
        %v1511 = vunpack.c.l.b16 %v1477
        %v1512 = vunpack.c.l.b16 %v1478
        %v1513 = vunpack.c.l.b16 %v1479
        %v1514 = vunpack.c.l.b16 %v1480
        %v1515 = vunpack.c.l.b16 %v1481
        %v1516 = vunpack.c.l.b16 %v1482
        %v1517 = vpack.c.b16 %v1502, %v1501
        %v1518 = vpack.c.b16 %v1504, %v1503
        %v1519 = vpack.c.b16 %v1506, %v1505
        %v1520 = vpack.c.b16 %v1508, %v1507
        %v1521 = vpack.c.b16 %v1510, %v1509
        %v1522 = vpack.c.b16 %v1512, %v1511
        %v1523 = vpack.c.b16 %v1514, %v1513
        %v1524 = vpack.c.b16 %v1516, %v1515
        %v1526 = vsel %vm978, %v1517, 0
        %v1529 = vsel %vm978, %v1518, 0
        %v1532 = vsel %vm978, %v1519, 0
        %v1535 = vsel %vm978, %v1520, 0
        %v1538 = vsel %vm978, %v1521, 0
        %v1541 = vsel %vm978, %v1522, 0
        %v1544 = vsel %vm978, %v1523, 0
        %v1547 = vsel %vm978, %v1524, 0
        %v1550 = vsel %vm1003, %v1484, 0
        %1552 = vmatprep.subr.bf16.mxu0 0
        %1553 = vmatpush1.bf16.msra.mxu0 0
        %1554 = vmatprep.subr.bf16.mxu0 0
        %1555 = vmatpush1.bf16.msra.mxu0 0
        %1556 = vmatprep.subr.bf16.mxu0 0
        %1557 = vmatpush1.bf16.msra.mxu0 0
        %1558 = vmatprep.subr.bf16.mxu0 0
        %1559 = vmatpush1.bf16.msra.mxu0 0
        %1560 = vmatprep.subr.bf16.mxu0 0
        %1561 = vmatpush1.bf16.msra.mxu0 0
        %1562 = vmatprep.subr.bf16.mxu0 0
        %1563 = vmatpush1.bf16.msra.mxu0 0
        %1564 = vmatprep.subr.bf16.mxu0 0
        %1565 = vmatpush1.bf16.msra.mxu0 0
        %1566 = vmatprep.subr.bf16.mxu0 0
        %1567 = vmatpush1.bf16.msra.mxu0 %v1550
        %1568 = vmatprep.subr.bf16.mxu0 0
        %1569 = vmatpush2.bf16.msra.mxu0 0
        %1570 = vmatprep.subr.bf16.mxu0 0
        %1571 = vmatpush2.bf16.msra.mxu0 0
        %1572 = vmatprep.subr.bf16.mxu0 0
        %1573 = vmatpush2.bf16.msra.mxu0 0
        %1574 = vmatprep.subr.bf16.mxu0 0
        %1575 = vmatpush2.bf16.msra.mxu0 0
        %1576 = vmatprep.subr.bf16.mxu0 0
        %1577 = vmatpush2.bf16.msra.mxu0 0
        %1578 = vmatprep.subr.bf16.mxu0 0
        %1579 = vmatpush2.bf16.msra.mxu0 0
        %1580 = vmatprep.subr.bf16.mxu0 0
        %1581 = vmatpush2.bf16.msra.mxu0 0
        %1582 = vmatprep.subr.bf16.mxu0 0
        %1583 = vmatpush2.bf16.msra.mxu0 0
        %1584 = vmatprep.mubr.bf16.mxu0 0
        %1585 = vmatmul.mubr.bf16.gmra.mxu0 %v1526
        %v1586 = vpop.f32.mrf.mxu0
        %v1587 = vadd.f32 0.0, %v1586
        %v1588 = vpop.f32.mrf.mxu0
        %v1589 = vpop.f32.mrf.mxu0
        %v1590 = vadd.f32 0.0, %v1589
        %v1591 = vpop.f32.mrf.mxu0
        %1592 = vmatprep.mubr.bf16.mxu0 0
        %1593 = vmatmul.mubr.bf16.gmra.mxu0 %v1529
        %v1594 = vpop.f32.mrf.mxu0
        %v1595 = vadd.f32 0.0, %v1594
        %v1596 = vpop.f32.mrf.mxu0
        %v1597 = vpop.f32.mrf.mxu0
        %v1598 = vadd.f32 0.0, %v1597
        %v1599 = vpop.f32.mrf.mxu0
        %1600 = vmatprep.mubr.bf16.mxu0 0
        %1601 = vmatmul.mubr.bf16.gmra.mxu0 %v1532
        %v1602 = vpop.f32.mrf.mxu0
        %v1603 = vadd.f32 0.0, %v1602
        %v1604 = vpop.f32.mrf.mxu0
        %v1605 = vpop.f32.mrf.mxu0
        %v1606 = vadd.f32 0.0, %v1605
        %v1607 = vpop.f32.mrf.mxu0
        %1608 = vmatprep.mubr.bf16.mxu0 0
        %1609 = vmatmul.mubr.bf16.gmra.mxu0 %v1535
        %v1610 = vpop.f32.mrf.mxu0
        %v1611 = vadd.f32 0.0, %v1610
        %v1612 = vpop.f32.mrf.mxu0
        %v1613 = vpop.f32.mrf.mxu0
        %v1614 = vadd.f32 0.0, %v1613
        %v1615 = vpop.f32.mrf.mxu0
        %1616 = vmatprep.mubr.bf16.mxu0 0
        %1617 = vmatmul.mubr.bf16.gmra.mxu0 %v1538
        %v1618 = vpop.f32.mrf.mxu0
        %v1619 = vadd.f32 0.0, %v1618
        %v1620 = vpop.f32.mrf.mxu0
        %v1621 = vpop.f32.mrf.mxu0
        %v1622 = vadd.f32 0.0, %v1621
        %v1623 = vpop.f32.mrf.mxu0
        %1624 = vmatprep.mubr.bf16.mxu0 0
        %1625 = vmatmul.mubr.bf16.gmra.mxu0 %v1541
        %v1626 = vpop.f32.mrf.mxu0
        %v1627 = vadd.f32 0.0, %v1626
        %v1628 = vpop.f32.mrf.mxu0
        %v1629 = vpop.f32.mrf.mxu0
        %v1630 = vadd.f32 0.0, %v1629
        %v1631 = vpop.f32.mrf.mxu0
        %1632 = vmatprep.mubr.bf16.mxu0 0
        %1633 = vmatmul.mubr.bf16.gmra.mxu0 %v1544
        %v1634 = vpop.f32.mrf.mxu0
        %v1635 = vadd.f32 0.0, %v1634
        %v1636 = vpop.f32.mrf.mxu0
        %v1637 = vpop.f32.mrf.mxu0
        %v1638 = vadd.f32 0.0, %v1637
        %v1639 = vpop.f32.mrf.mxu0
        %1640 = vmatprep.mubr.bf16.mxu0 0
        %1641 = vmatmul.mubr.bf16.gmra.mxu0 %v1547
        %v1642 = vpop.f32.mrf.mxu0
        %v1643 = vadd.f32 0.0, %v1642
        %v1644 = vpop.f32.mrf.mxu0
        %v1645 = vpop.f32.mrf.mxu0
        %v1646 = vadd.f32 0.0, %v1645
        %v1647 = vpop.f32.mrf.mxu0
        %1648 = vdwg.mxu0
        %v1649 = vadd.f32 %v1450, %v1587
        %v1650 = vadd.f32 %v1451, %v1590
        %v1651 = vadd.f32 %v1452, %v1595
        %v1652 = vadd.f32 %v1453, %v1598
        %v1653 = vadd.f32 %v1454, %v1603
        %v1654 = vadd.f32 %v1455, %v1606
        %v1655 = vadd.f32 %v1456, %v1611
        %v1656 = vadd.f32 %v1457, %v1614
        %v1657 = vadd.f32 %v1458, %v1619
        %v1658 = vadd.f32 %v1459, %v1622
        %v1659 = vadd.f32 %v1460, %v1627
        %v1660 = vadd.f32 %v1461, %v1630
        %v1661 = vadd.f32 %v1462, %v1635
        %v1662 = vadd.f32 %v1463, %v1638
        %v1663 = vadd.f32 %v1464, %v1643
        %v1664 = vadd.f32 %v1465, %v1646
        %s1665 = scalar_lea.vmem [#allocation2], 88
        %v1666 = vld [vmem:[%s1665] sm:$0xf]
        %v1667 = vld [vmem:[%s1665 + $0x4] sm:$0xf]
        %v1668 = vld [vmem:[%s1665 + $0x8] sm:$0xf]
        %v1669 = vld [vmem:[%s1665 + $0xc] sm:$0xf]
        %v1670 = vld [vmem:[%s1665 + $0x10] sm:$0xf]
        %v1671 = vld [vmem:[%s1665 + $0x14] sm:$0xf]
        %v1672 = vld [vmem:[%s1665 + $0x18] sm:$0xf]
        %v1673 = vld [vmem:[%s1665 + $0x1c] sm:$0xf]
        %v1674 = vld [vmem:[%s1665 + $0x20] sm:$0xf]
        %v1675 = vld [vmem:[%s1665 + $0x24] sm:$0xf]
        %v1676 = vld [vmem:[%s1665 + $0x28] sm:$0xf]
        %v1677 = vld [vmem:[%s1665 + $0x2c] sm:$0xf]
        %v1678 = vld [vmem:[%s1665 + $0x30] sm:$0xf]
        %v1679 = vld [vmem:[%s1665 + $0x34] sm:$0xf]
        %v1680 = vld [vmem:[%s1665 + $0x38] sm:$0xf]
        %v1681 = vld [vmem:[%s1665 + $0x3c] sm:$0xf]
        %s1682 = scalar_lea.vmem %s362, 8
        %v1683 = vld [vmem:[%s1682] sm:$0x3]
        %v1700 = vunpack.c.l.b16 %v1666
        %v1701 = vunpack.c.l.b16 %v1667
        %v1702 = vunpack.c.l.b16 %v1668
        %v1703 = vunpack.c.l.b16 %v1669
        %v1704 = vunpack.c.l.b16 %v1670
        %v1705 = vunpack.c.l.b16 %v1671
        %v1706 = vunpack.c.l.b16 %v1672
        %v1707 = vunpack.c.l.b16 %v1673
        %v1708 = vunpack.c.l.b16 %v1674
        %v1709 = vunpack.c.l.b16 %v1675
        %v1710 = vunpack.c.l.b16 %v1676
        %v1711 = vunpack.c.l.b16 %v1677
        %v1712 = vunpack.c.l.b16 %v1678
        %v1713 = vunpack.c.l.b16 %v1679
        %v1714 = vunpack.c.l.b16 %v1680
        %v1715 = vunpack.c.l.b16 %v1681
        %v1716 = vpack.c.b16 %v1701, %v1700
        %v1717 = vpack.c.b16 %v1703, %v1702
        %v1718 = vpack.c.b16 %v1705, %v1704
        %v1719 = vpack.c.b16 %v1707, %v1706
        %v1720 = vpack.c.b16 %v1709, %v1708
        %v1721 = vpack.c.b16 %v1711, %v1710
        %v1722 = vpack.c.b16 %v1713, %v1712
        %v1723 = vpack.c.b16 %v1715, %v1714
        %v1725 = vsel %vm978, %v1716, 0
        %v1728 = vsel %vm978, %v1717, 0
        %v1731 = vsel %vm978, %v1718, 0
        %v1734 = vsel %vm978, %v1719, 0
        %v1737 = vsel %vm978, %v1720, 0
        %v1740 = vsel %vm978, %v1721, 0
        %v1743 = vsel %vm978, %v1722, 0
        %v1746 = vsel %vm978, %v1723, 0
        %v1749 = vsel %vm1003, %v1683, 0
        %1751 = vmatprep.subr.bf16.mxu0 0
        %1752 = vmatpush1.bf16.msra.mxu0 0
        %1753 = vmatprep.subr.bf16.mxu0 0
        %1754 = vmatpush1.bf16.msra.mxu0 0
        %1755 = vmatprep.subr.bf16.mxu0 0
        %1756 = vmatpush1.bf16.msra.mxu0 0
        %1757 = vmatprep.subr.bf16.mxu0 0
        %1758 = vmatpush1.bf16.msra.mxu0 0
        %1759 = vmatprep.subr.bf16.mxu0 0
        %1760 = vmatpush1.bf16.msra.mxu0 0
        %1761 = vmatprep.subr.bf16.mxu0 0
        %1762 = vmatpush1.bf16.msra.mxu0 0
        %1763 = vmatprep.subr.bf16.mxu0 0
        %1764 = vmatpush1.bf16.msra.mxu0 0
        %1765 = vmatprep.subr.bf16.mxu0 0
        %1766 = vmatpush1.bf16.msra.mxu0 %v1749
        %1767 = vmatprep.subr.bf16.mxu0 0
        %1768 = vmatpush2.bf16.msra.mxu0 0
        %1769 = vmatprep.subr.bf16.mxu0 0
        %1770 = vmatpush2.bf16.msra.mxu0 0
        %1771 = vmatprep.subr.bf16.mxu0 0
        %1772 = vmatpush2.bf16.msra.mxu0 0
        %1773 = vmatprep.subr.bf16.mxu0 0
        %1774 = vmatpush2.bf16.msra.mxu0 0
        %1775 = vmatprep.subr.bf16.mxu0 0
        %1776 = vmatpush2.bf16.msra.mxu0 0
        %1777 = vmatprep.subr.bf16.mxu0 0
        %1778 = vmatpush2.bf16.msra.mxu0 0
        %1779 = vmatprep.subr.bf16.mxu0 0
        %1780 = vmatpush2.bf16.msra.mxu0 0
        %1781 = vmatprep.subr.bf16.mxu0 0
        %1782 = vmatpush2.bf16.msra.mxu0 0
        %1783 = vmatprep.mubr.bf16.mxu0 0
        %1784 = vmatmul.mubr.bf16.gmra.mxu0 %v1725
        %v1785 = vpop.f32.mrf.mxu0
        %v1786 = vadd.f32 0.0, %v1785
        %v1787 = vpop.f32.mrf.mxu0
        %v1788 = vpop.f32.mrf.mxu0
        %v1789 = vadd.f32 0.0, %v1788
        %v1790 = vpop.f32.mrf.mxu0
        %1791 = vmatprep.mubr.bf16.mxu0 0
        %1792 = vmatmul.mubr.bf16.gmra.mxu0 %v1728
        %v1793 = vpop.f32.mrf.mxu0
        %v1794 = vadd.f32 0.0, %v1793
        %v1795 = vpop.f32.mrf.mxu0
        %v1796 = vpop.f32.mrf.mxu0
        %v1797 = vadd.f32 0.0, %v1796
        %v1798 = vpop.f32.mrf.mxu0
        %1799 = vmatprep.mubr.bf16.mxu0 0
        %1800 = vmatmul.mubr.bf16.gmra.mxu0 %v1731
        %v1801 = vpop.f32.mrf.mxu0
        %v1802 = vadd.f32 0.0, %v1801
        %v1803 = vpop.f32.mrf.mxu0
        %v1804 = vpop.f32.mrf.mxu0
        %v1805 = vadd.f32 0.0, %v1804
        %v1806 = vpop.f32.mrf.mxu0
        %1807 = vmatprep.mubr.bf16.mxu0 0
        %1808 = vmatmul.mubr.bf16.gmra.mxu0 %v1734
        %v1809 = vpop.f32.mrf.mxu0
        %v1810 = vadd.f32 0.0, %v1809
        %v1811 = vpop.f32.mrf.mxu0
        %v1812 = vpop.f32.mrf.mxu0
        %v1813 = vadd.f32 0.0, %v1812
        %v1814 = vpop.f32.mrf.mxu0
        %1815 = vmatprep.mubr.bf16.mxu0 0
        %1816 = vmatmul.mubr.bf16.gmra.mxu0 %v1737
        %v1817 = vpop.f32.mrf.mxu0
        %v1818 = vadd.f32 0.0, %v1817
        %v1819 = vpop.f32.mrf.mxu0
        %v1820 = vpop.f32.mrf.mxu0
        %v1821 = vadd.f32 0.0, %v1820
        %v1822 = vpop.f32.mrf.mxu0
        %1823 = vmatprep.mubr.bf16.mxu0 0
        %1824 = vmatmul.mubr.bf16.gmra.mxu0 %v1740
        %v1825 = vpop.f32.mrf.mxu0
        %v1826 = vadd.f32 0.0, %v1825
        %v1827 = vpop.f32.mrf.mxu0
        %v1828 = vpop.f32.mrf.mxu0
        %v1829 = vadd.f32 0.0, %v1828
        %v1830 = vpop.f32.mrf.mxu0
        %1831 = vmatprep.mubr.bf16.mxu0 0
        %1832 = vmatmul.mubr.bf16.gmra.mxu0 %v1743
        %v1833 = vpop.f32.mrf.mxu0
        %v1834 = vadd.f32 0.0, %v1833
        %v1835 = vpop.f32.mrf.mxu0
        %v1836 = vpop.f32.mrf.mxu0
        %v1837 = vadd.f32 0.0, %v1836
        %v1838 = vpop.f32.mrf.mxu0
        %1839 = vmatprep.mubr.bf16.mxu0 0
        %1840 = vmatmul.mubr.bf16.gmra.mxu0 %v1746
        %v1841 = vpop.f32.mrf.mxu0
        %v1842 = vadd.f32 0.0, %v1841
        %v1843 = vpop.f32.mrf.mxu0
        %v1844 = vpop.f32.mrf.mxu0
        %v1845 = vadd.f32 0.0, %v1844
        %v1846 = vpop.f32.mrf.mxu0
        %1847 = vdwg.mxu0
        %v1848 = vadd.f32 %v1649, %v1786
        %v1849 = vadd.f32 %v1650, %v1789
        %v1850 = vadd.f32 %v1651, %v1794
        %v1851 = vadd.f32 %v1652, %v1797
        %v1852 = vadd.f32 %v1653, %v1802
        %v1853 = vadd.f32 %v1654, %v1805
        %v1854 = vadd.f32 %v1655, %v1810
        %v1855 = vadd.f32 %v1656, %v1813
        %v1856 = vadd.f32 %v1657, %v1818
        %v1857 = vadd.f32 %v1658, %v1821
        %v1858 = vadd.f32 %v1659, %v1826
        %v1859 = vadd.f32 %v1660, %v1829
        %v1860 = vadd.f32 %v1661, %v1834
        %v1861 = vadd.f32 %v1662, %v1837
        %v1862 = vadd.f32 %v1663, %v1842
        %v1863 = vadd.f32 %v1664, %v1845
        %s1864 = scalar_lea.vmem [#allocation2], 168
        %v1865 = vld [vmem:[%s1864] sm:$0xf]
        %v1866 = vld [vmem:[%s1864 + $0x4] sm:$0xf]
        %v1867 = vld [vmem:[%s1864 + $0x8] sm:$0xf]
        %v1868 = vld [vmem:[%s1864 + $0xc] sm:$0xf]
        %v1869 = vld [vmem:[%s1864 + $0x10] sm:$0xf]
        %v1870 = vld [vmem:[%s1864 + $0x14] sm:$0xf]
        %v1871 = vld [vmem:[%s1864 + $0x18] sm:$0xf]
        %v1872 = vld [vmem:[%s1864 + $0x1c] sm:$0xf]
        %v1873 = vld [vmem:[%s1864 + $0x20] sm:$0xf]
        %v1874 = vld [vmem:[%s1864 + $0x24] sm:$0xf]
        %v1875 = vld [vmem:[%s1864 + $0x28] sm:$0xf]
        %v1876 = vld [vmem:[%s1864 + $0x2c] sm:$0xf]
        %v1877 = vld [vmem:[%s1864 + $0x30] sm:$0xf]
        %v1878 = vld [vmem:[%s1864 + $0x34] sm:$0xf]
        %v1879 = vld [vmem:[%s1864 + $0x38] sm:$0xf]
        %v1880 = vld [vmem:[%s1864 + $0x3c] sm:$0xf]
        %s1881 = scalar_lea.vmem %s362, 10
        %v1882 = vld [vmem:[%s1881] sm:$0x3]
        %v1899 = vunpack.c.l.b16 %v1865
        %v1900 = vunpack.c.l.b16 %v1866
        %v1901 = vunpack.c.l.b16 %v1867
        %v1902 = vunpack.c.l.b16 %v1868
        %v1903 = vunpack.c.l.b16 %v1869
        %v1904 = vunpack.c.l.b16 %v1870
        %v1905 = vunpack.c.l.b16 %v1871
        %v1906 = vunpack.c.l.b16 %v1872
        %v1907 = vunpack.c.l.b16 %v1873
        %v1908 = vunpack.c.l.b16 %v1874
        %v1909 = vunpack.c.l.b16 %v1875
        %v1910 = vunpack.c.l.b16 %v1876
        %v1911 = vunpack.c.l.b16 %v1877
        %v1912 = vunpack.c.l.b16 %v1878
        %v1913 = vunpack.c.l.b16 %v1879
        %v1914 = vunpack.c.l.b16 %v1880
        %v1915 = vpack.c.b16 %v1900, %v1899
        %v1916 = vpack.c.b16 %v1902, %v1901
        %v1917 = vpack.c.b16 %v1904, %v1903
        %v1918 = vpack.c.b16 %v1906, %v1905
        %v1919 = vpack.c.b16 %v1908, %v1907
        %v1920 = vpack.c.b16 %v1910, %v1909
        %v1921 = vpack.c.b16 %v1912, %v1911
        %v1922 = vpack.c.b16 %v1914, %v1913
        %v1924 = vsel %vm978, %v1915, 0
        %v1927 = vsel %vm978, %v1916, 0
        %v1930 = vsel %vm978, %v1917, 0
        %v1933 = vsel %vm978, %v1918, 0
        %v1936 = vsel %vm978, %v1919, 0
        %v1939 = vsel %vm978, %v1920, 0
        %v1942 = vsel %vm978, %v1921, 0
        %v1945 = vsel %vm978, %v1922, 0
        %v1948 = vsel %vm1003, %v1882, 0
        %1950 = vmatprep.subr.bf16.mxu0 0
        %1951 = vmatpush1.bf16.msra.mxu0 0
        %1952 = vmatprep.subr.bf16.mxu0 0
        %1953 = vmatpush1.bf16.msra.mxu0 0
        %1954 = vmatprep.subr.bf16.mxu0 0
        %1955 = vmatpush1.bf16.msra.mxu0 0
        %1956 = vmatprep.subr.bf16.mxu0 0
        %1957 = vmatpush1.bf16.msra.mxu0 0
        %1958 = vmatprep.subr.bf16.mxu0 0
        %1959 = vmatpush1.bf16.msra.mxu0 0
        %1960 = vmatprep.subr.bf16.mxu0 0
        %1961 = vmatpush1.bf16.msra.mxu0 0
        %1962 = vmatprep.subr.bf16.mxu0 0
        %1963 = vmatpush1.bf16.msra.mxu0 0
        %1964 = vmatprep.subr.bf16.mxu0 0
        %1965 = vmatpush1.bf16.msra.mxu0 %v1948
        %1966 = vmatprep.subr.bf16.mxu0 0
        %1967 = vmatpush2.bf16.msra.mxu0 0
        %1968 = vmatprep.subr.bf16.mxu0 0
        %1969 = vmatpush2.bf16.msra.mxu0 0
        %1970 = vmatprep.subr.bf16.mxu0 0
        %1971 = vmatpush2.bf16.msra.mxu0 0
        %1972 = vmatprep.subr.bf16.mxu0 0
        %1973 = vmatpush2.bf16.msra.mxu0 0
        %1974 = vmatprep.subr.bf16.mxu0 0
        %1975 = vmatpush2.bf16.msra.mxu0 0
        %1976 = vmatprep.subr.bf16.mxu0 0
        %1977 = vmatpush2.bf16.msra.mxu0 0
        %1978 = vmatprep.subr.bf16.mxu0 0
        %1979 = vmatpush2.bf16.msra.mxu0 0
        %1980 = vmatprep.subr.bf16.mxu0 0
        %1981 = vmatpush2.bf16.msra.mxu0 0
        %1982 = vmatprep.mubr.bf16.mxu0 0
        %1983 = vmatmul.mubr.bf16.gmra.mxu0 %v1924
        %v1984 = vpop.f32.mrf.mxu0
        %v1985 = vadd.f32 0.0, %v1984
        %v1986 = vpop.f32.mrf.mxu0
        %v1987 = vpop.f32.mrf.mxu0
        %v1988 = vadd.f32 0.0, %v1987
        %v1989 = vpop.f32.mrf.mxu0
        %1990 = vmatprep.mubr.bf16.mxu0 0
        %1991 = vmatmul.mubr.bf16.gmra.mxu0 %v1927
        %v1992 = vpop.f32.mrf.mxu0
        %v1993 = vadd.f32 0.0, %v1992
        %v1994 = vpop.f32.mrf.mxu0
        %v1995 = vpop.f32.mrf.mxu0
        %v1996 = vadd.f32 0.0, %v1995
        %v1997 = vpop.f32.mrf.mxu0
        %1998 = vmatprep.mubr.bf16.mxu0 0
        %1999 = vmatmul.mubr.bf16.gmra.mxu0 %v1930
        %v2000 = vpop.f32.mrf.mxu0
        %v2001 = vadd.f32 0.0, %v2000
        %v2002 = vpop.f32.mrf.mxu0
        %v2003 = vpop.f32.mrf.mxu0
        %v2004 = vadd.f32 0.0, %v2003
        %v2005 = vpop.f32.mrf.mxu0
        %2006 = vmatprep.mubr.bf16.mxu0 0
        %2007 = vmatmul.mubr.bf16.gmra.mxu0 %v1933
        %v2008 = vpop.f32.mrf.mxu0
        %v2009 = vadd.f32 0.0, %v2008
        %v2010 = vpop.f32.mrf.mxu0
        %v2011 = vpop.f32.mrf.mxu0
        %v2012 = vadd.f32 0.0, %v2011
        %v2013 = vpop.f32.mrf.mxu0
        %2014 = vmatprep.mubr.bf16.mxu0 0
        %2015 = vmatmul.mubr.bf16.gmra.mxu0 %v1936
        %v2016 = vpop.f32.mrf.mxu0
        %v2017 = vadd.f32 0.0, %v2016
        %v2018 = vpop.f32.mrf.mxu0
        %v2019 = vpop.f32.mrf.mxu0
        %v2020 = vadd.f32 0.0, %v2019
        %v2021 = vpop.f32.mrf.mxu0
        %2022 = vmatprep.mubr.bf16.mxu0 0
        %2023 = vmatmul.mubr.bf16.gmra.mxu0 %v1939
        %v2024 = vpop.f32.mrf.mxu0
        %v2025 = vadd.f32 0.0, %v2024
        %v2026 = vpop.f32.mrf.mxu0
        %v2027 = vpop.f32.mrf.mxu0
        %v2028 = vadd.f32 0.0, %v2027
        %v2029 = vpop.f32.mrf.mxu0
        %2030 = vmatprep.mubr.bf16.mxu0 0
        %2031 = vmatmul.mubr.bf16.gmra.mxu0 %v1942
        %v2032 = vpop.f32.mrf.mxu0
        %v2033 = vadd.f32 0.0, %v2032
        %v2034 = vpop.f32.mrf.mxu0
        %v2035 = vpop.f32.mrf.mxu0
        %v2036 = vadd.f32 0.0, %v2035
        %v2037 = vpop.f32.mrf.mxu0
        %2038 = vmatprep.mubr.bf16.mxu0 0
        %2039 = vmatmul.mubr.bf16.gmra.mxu0 %v1945
        %v2040 = vpop.f32.mrf.mxu0
        %v2041 = vadd.f32 0.0, %v2040
        %v2042 = vpop.f32.mrf.mxu0
        %v2043 = vpop.f32.mrf.mxu0
        %v2044 = vadd.f32 0.0, %v2043
        %v2045 = vpop.f32.mrf.mxu0
        %2046 = vdwg.mxu0
        %v2047 = vadd.f32 %v1848, %v1985
        %v2048 = vadd.f32 %v1849, %v1988
        %v2049 = vadd.f32 %v1850, %v1993
        %v2050 = vadd.f32 %v1851, %v1996
        %v2051 = vadd.f32 %v1852, %v2001
        %v2052 = vadd.f32 %v1853, %v2004
        %v2053 = vadd.f32 %v1854, %v2009
        %v2054 = vadd.f32 %v1855, %v2012
        %v2055 = vadd.f32 %v1856, %v2017
        %v2056 = vadd.f32 %v1857, %v2020
        %v2057 = vadd.f32 %v1858, %v2025
        %v2058 = vadd.f32 %v1859, %v2028
        %v2059 = vadd.f32 %v1860, %v2033
        %v2060 = vadd.f32 %v1861, %v2036
        %v2061 = vadd.f32 %v1862, %v2041
        %v2062 = vadd.f32 %v1863, %v2044
        %s2063 = scalar_lea.vmem [#allocation2], 16
        %v2064 = vld [vmem:[%s2063] sm:$0xf]
        %v2065 = vld [vmem:[%s2063 + $0x4] sm:$0xf]
        %v2066 = vld [vmem:[%s2063 + $0x8] sm:$0xf]
        %v2067 = vld [vmem:[%s2063 + $0xc] sm:$0xf]
        %v2068 = vld [vmem:[%s2063 + $0x10] sm:$0xf]
        %v2069 = vld [vmem:[%s2063 + $0x14] sm:$0xf]
        %v2070 = vld [vmem:[%s2063 + $0x18] sm:$0xf]
        %v2071 = vld [vmem:[%s2063 + $0x1c] sm:$0xf]
        %v2072 = vld [vmem:[%s2063 + $0x20] sm:$0xf]
        %v2073 = vld [vmem:[%s2063 + $0x24] sm:$0xf]
        %v2074 = vld [vmem:[%s2063 + $0x28] sm:$0xf]
        %v2075 = vld [vmem:[%s2063 + $0x2c] sm:$0xf]
        %v2076 = vld [vmem:[%s2063 + $0x30] sm:$0xf]
        %v2077 = vld [vmem:[%s2063 + $0x34] sm:$0xf]
        %v2078 = vld [vmem:[%s2063 + $0x38] sm:$0xf]
        %v2079 = vld [vmem:[%s2063 + $0x3c] sm:$0xf]
        %s2080 = scalar_lea.vmem %s362, 12
        %v2081 = vld [vmem:[%s2080] sm:$0x3]
        %v2098 = vunpack.c.l.b16 %v2064
        %v2099 = vunpack.c.l.b16 %v2065
        %v2100 = vunpack.c.l.b16 %v2066
        %v2101 = vunpack.c.l.b16 %v2067
        %v2102 = vunpack.c.l.b16 %v2068
        %v2103 = vunpack.c.l.b16 %v2069
        %v2104 = vunpack.c.l.b16 %v2070
        %v2105 = vunpack.c.l.b16 %v2071
        %v2106 = vunpack.c.l.b16 %v2072
        %v2107 = vunpack.c.l.b16 %v2073
        %v2108 = vunpack.c.l.b16 %v2074
        %v2109 = vunpack.c.l.b16 %v2075
        %v2110 = vunpack.c.l.b16 %v2076
        %v2111 = vunpack.c.l.b16 %v2077
        %v2112 = vunpack.c.l.b16 %v2078
        %v2113 = vunpack.c.l.b16 %v2079
        %v2114 = vpack.c.b16 %v2099, %v2098
        %v2115 = vpack.c.b16 %v2101, %v2100
        %v2116 = vpack.c.b16 %v2103, %v2102
        %v2117 = vpack.c.b16 %v2105, %v2104
        %v2118 = vpack.c.b16 %v2107, %v2106
        %v2119 = vpack.c.b16 %v2109, %v2108
        %v2120 = vpack.c.b16 %v2111, %v2110
        %v2121 = vpack.c.b16 %v2113, %v2112
        %v2123 = vsel %vm978, %v2114, 0
        %v2126 = vsel %vm978, %v2115, 0
        %v2129 = vsel %vm978, %v2116, 0
        %v2132 = vsel %vm978, %v2117, 0
        %v2135 = vsel %vm978, %v2118, 0
        %v2138 = vsel %vm978, %v2119, 0
        %v2141 = vsel %vm978, %v2120, 0
        %v2144 = vsel %vm978, %v2121, 0
        %v2147 = vsel %vm1003, %v2081, 0
        %2149 = vmatprep.subr.bf16.mxu0 0
        %2150 = vmatpush1.bf16.msra.mxu0 0
        %2151 = vmatprep.subr.bf16.mxu0 0
        %2152 = vmatpush1.bf16.msra.mxu0 0
        %2153 = vmatprep.subr.bf16.mxu0 0
        %2154 = vmatpush1.bf16.msra.mxu0 0
        %2155 = vmatprep.subr.bf16.mxu0 0
        %2156 = vmatpush1.bf16.msra.mxu0 0
        %2157 = vmatprep.subr.bf16.mxu0 0
        %2158 = vmatpush1.bf16.msra.mxu0 0
        %2159 = vmatprep.subr.bf16.mxu0 0
        %2160 = vmatpush1.bf16.msra.mxu0 0
        %2161 = vmatprep.subr.bf16.mxu0 0
        %2162 = vmatpush1.bf16.msra.mxu0 0
        %2163 = vmatprep.subr.bf16.mxu0 0
        %2164 = vmatpush1.bf16.msra.mxu0 %v2147
        %2165 = vmatprep.subr.bf16.mxu0 0
        %2166 = vmatpush2.bf16.msra.mxu0 0
        %2167 = vmatprep.subr.bf16.mxu0 0
        %2168 = vmatpush2.bf16.msra.mxu0 0
        %2169 = vmatprep.subr.bf16.mxu0 0
        %2170 = vmatpush2.bf16.msra.mxu0 0
        %2171 = vmatprep.subr.bf16.mxu0 0
        %2172 = vmatpush2.bf16.msra.mxu0 0
        %2173 = vmatprep.subr.bf16.mxu0 0
        %2174 = vmatpush2.bf16.msra.mxu0 0
        %2175 = vmatprep.subr.bf16.mxu0 0
        %2176 = vmatpush2.bf16.msra.mxu0 0
        %2177 = vmatprep.subr.bf16.mxu0 0
        %2178 = vmatpush2.bf16.msra.mxu0 0
        %2179 = vmatprep.subr.bf16.mxu0 0
        %2180 = vmatpush2.bf16.msra.mxu0 0
        %2181 = vmatprep.mubr.bf16.mxu0 0
        %2182 = vmatmul.mubr.bf16.gmra.mxu0 %v2123
        %v2183 = vpop.f32.mrf.mxu0
        %v2184 = vadd.f32 0.0, %v2183
        %v2185 = vpop.f32.mrf.mxu0
        %v2186 = vpop.f32.mrf.mxu0
        %v2187 = vadd.f32 0.0, %v2186
        %v2188 = vpop.f32.mrf.mxu0
        %2189 = vmatprep.mubr.bf16.mxu0 0
        %2190 = vmatmul.mubr.bf16.gmra.mxu0 %v2126
        %v2191 = vpop.f32.mrf.mxu0
        %v2192 = vadd.f32 0.0, %v2191
        %v2193 = vpop.f32.mrf.mxu0
        %v2194 = vpop.f32.mrf.mxu0
        %v2195 = vadd.f32 0.0, %v2194
        %v2196 = vpop.f32.mrf.mxu0
        %2197 = vmatprep.mubr.bf16.mxu0 0
        %2198 = vmatmul.mubr.bf16.gmra.mxu0 %v2129
        %v2199 = vpop.f32.mrf.mxu0
        %v2200 = vadd.f32 0.0, %v2199
        %v2201 = vpop.f32.mrf.mxu0
        %v2202 = vpop.f32.mrf.mxu0
        %v2203 = vadd.f32 0.0, %v2202
        %v2204 = vpop.f32.mrf.mxu0
        %2205 = vmatprep.mubr.bf16.mxu0 0
        %2206 = vmatmul.mubr.bf16.gmra.mxu0 %v2132
        %v2207 = vpop.f32.mrf.mxu0
        %v2208 = vadd.f32 0.0, %v2207
        %v2209 = vpop.f32.mrf.mxu0
        %v2210 = vpop.f32.mrf.mxu0
        %v2211 = vadd.f32 0.0, %v2210
        %v2212 = vpop.f32.mrf.mxu0
        %2213 = vmatprep.mubr.bf16.mxu0 0
        %2214 = vmatmul.mubr.bf16.gmra.mxu0 %v2135
        %v2215 = vpop.f32.mrf.mxu0
        %v2216 = vadd.f32 0.0, %v2215
        %v2217 = vpop.f32.mrf.mxu0
        %v2218 = vpop.f32.mrf.mxu0
        %v2219 = vadd.f32 0.0, %v2218
        %v2220 = vpop.f32.mrf.mxu0
        %2221 = vmatprep.mubr.bf16.mxu0 0
        %2222 = vmatmul.mubr.bf16.gmra.mxu0 %v2138
        %v2223 = vpop.f32.mrf.mxu0
        %v2224 = vadd.f32 0.0, %v2223
        %v2225 = vpop.f32.mrf.mxu0
        %v2226 = vpop.f32.mrf.mxu0
        %v2227 = vadd.f32 0.0, %v2226
        %v2228 = vpop.f32.mrf.mxu0
        %2229 = vmatprep.mubr.bf16.mxu0 0
        %2230 = vmatmul.mubr.bf16.gmra.mxu0 %v2141
        %v2231 = vpop.f32.mrf.mxu0
        %v2232 = vadd.f32 0.0, %v2231
        %v2233 = vpop.f32.mrf.mxu0
        %v2234 = vpop.f32.mrf.mxu0
        %v2235 = vadd.f32 0.0, %v2234
        %v2236 = vpop.f32.mrf.mxu0
        %2237 = vmatprep.mubr.bf16.mxu0 0
        %2238 = vmatmul.mubr.bf16.gmra.mxu0 %v2144
        %v2239 = vpop.f32.mrf.mxu0
        %v2240 = vadd.f32 0.0, %v2239
        %v2241 = vpop.f32.mrf.mxu0
        %v2242 = vpop.f32.mrf.mxu0
        %v2243 = vadd.f32 0.0, %v2242
        %v2244 = vpop.f32.mrf.mxu0
        %2245 = vdwg.mxu0
        %v2246 = vadd.f32 %v2047, %v2184
        %v2247 = vadd.f32 %v2048, %v2187
        %v2248 = vadd.f32 %v2049, %v2192
        %v2249 = vadd.f32 %v2050, %v2195
        %v2250 = vadd.f32 %v2051, %v2200
        %v2251 = vadd.f32 %v2052, %v2203
        %v2252 = vadd.f32 %v2053, %v2208
        %v2253 = vadd.f32 %v2054, %v2211
        %v2254 = vadd.f32 %v2055, %v2216
        %v2255 = vadd.f32 %v2056, %v2219
        %v2256 = vadd.f32 %v2057, %v2224
        %v2257 = vadd.f32 %v2058, %v2227
        %v2258 = vadd.f32 %v2059, %v2232
        %v2259 = vadd.f32 %v2060, %v2235
        %v2260 = vadd.f32 %v2061, %v2240
        %v2261 = vadd.f32 %v2062, %v2243
        %s2262 = scalar_lea.vmem [#allocation2], 96
        %v2263 = vld [vmem:[%s2262] sm:$0xf]
        %v2264 = vld [vmem:[%s2262 + $0x4] sm:$0xf]
        %v2265 = vld [vmem:[%s2262 + $0x8] sm:$0xf]
        %v2266 = vld [vmem:[%s2262 + $0xc] sm:$0xf]
        %v2267 = vld [vmem:[%s2262 + $0x10] sm:$0xf]
        %v2268 = vld [vmem:[%s2262 + $0x14] sm:$0xf]
        %v2269 = vld [vmem:[%s2262 + $0x18] sm:$0xf]
        %v2270 = vld [vmem:[%s2262 + $0x1c] sm:$0xf]
        %v2271 = vld [vmem:[%s2262 + $0x20] sm:$0xf]
        %v2272 = vld [vmem:[%s2262 + $0x24] sm:$0xf]
        %v2273 = vld [vmem:[%s2262 + $0x28] sm:$0xf]
        %v2274 = vld [vmem:[%s2262 + $0x2c] sm:$0xf]
        %v2275 = vld [vmem:[%s2262 + $0x30] sm:$0xf]
        %v2276 = vld [vmem:[%s2262 + $0x34] sm:$0xf]
        %v2277 = vld [vmem:[%s2262 + $0x38] sm:$0xf]
        %v2278 = vld [vmem:[%s2262 + $0x3c] sm:$0xf]
        %s2279 = scalar_lea.vmem %s362, 14
        %v2280 = vld [vmem:[%s2279] sm:$0x3]
        %v2297 = vunpack.c.l.b16 %v2263
        %v2298 = vunpack.c.l.b16 %v2264
        %v2299 = vunpack.c.l.b16 %v2265
        %v2300 = vunpack.c.l.b16 %v2266
        %v2301 = vunpack.c.l.b16 %v2267
        %v2302 = vunpack.c.l.b16 %v2268
        %v2303 = vunpack.c.l.b16 %v2269
        %v2304 = vunpack.c.l.b16 %v2270
        %v2305 = vunpack.c.l.b16 %v2271
        %v2306 = vunpack.c.l.b16 %v2272
        %v2307 = vunpack.c.l.b16 %v2273
        %v2308 = vunpack.c.l.b16 %v2274
        %v2309 = vunpack.c.l.b16 %v2275
        %v2310 = vunpack.c.l.b16 %v2276
        %v2311 = vunpack.c.l.b16 %v2277
        %v2312 = vunpack.c.l.b16 %v2278
        %v2313 = vpack.c.b16 %v2298, %v2297
        %v2314 = vpack.c.b16 %v2300, %v2299
        %v2315 = vpack.c.b16 %v2302, %v2301
        %v2316 = vpack.c.b16 %v2304, %v2303
        %v2317 = vpack.c.b16 %v2306, %v2305
        %v2318 = vpack.c.b16 %v2308, %v2307
        %v2319 = vpack.c.b16 %v2310, %v2309
        %v2320 = vpack.c.b16 %v2312, %v2311
        %v2322 = vsel %vm978, %v2313, 0
        %v2325 = vsel %vm978, %v2314, 0
        %v2328 = vsel %vm978, %v2315, 0
        %v2331 = vsel %vm978, %v2316, 0
        %v2334 = vsel %vm978, %v2317, 0
        %v2337 = vsel %vm978, %v2318, 0
        %v2340 = vsel %vm978, %v2319, 0
        %v2343 = vsel %vm978, %v2320, 0
        %v2346 = vsel %vm1003, %v2280, 0
        %2348 = vmatprep.subr.bf16.mxu0 0
        %2349 = vmatpush1.bf16.msra.mxu0 0
        %2350 = vmatprep.subr.bf16.mxu0 0
        %2351 = vmatpush1.bf16.msra.mxu0 0
        %2352 = vmatprep.subr.bf16.mxu0 0
        %2353 = vmatpush1.bf16.msra.mxu0 0
        %2354 = vmatprep.subr.bf16.mxu0 0
        %2355 = vmatpush1.bf16.msra.mxu0 0
        %2356 = vmatprep.subr.bf16.mxu0 0
        %2357 = vmatpush1.bf16.msra.mxu0 0
        %2358 = vmatprep.subr.bf16.mxu0 0
        %2359 = vmatpush1.bf16.msra.mxu0 0
        %2360 = vmatprep.subr.bf16.mxu0 0
        %2361 = vmatpush1.bf16.msra.mxu0 0
        %2362 = vmatprep.subr.bf16.mxu0 0
        %2363 = vmatpush1.bf16.msra.mxu0 %v2346
        %2364 = vmatprep.subr.bf16.mxu0 0
        %2365 = vmatpush2.bf16.msra.mxu0 0
        %2366 = vmatprep.subr.bf16.mxu0 0
        %2367 = vmatpush2.bf16.msra.mxu0 0
        %2368 = vmatprep.subr.bf16.mxu0 0
        %2369 = vmatpush2.bf16.msra.mxu0 0
        %2370 = vmatprep.subr.bf16.mxu0 0
        %2371 = vmatpush2.bf16.msra.mxu0 0
        %2372 = vmatprep.subr.bf16.mxu0 0
        %2373 = vmatpush2.bf16.msra.mxu0 0
        %2374 = vmatprep.subr.bf16.mxu0 0
        %2375 = vmatpush2.bf16.msra.mxu0 0
        %2376 = vmatprep.subr.bf16.mxu0 0
        %2377 = vmatpush2.bf16.msra.mxu0 0
        %2378 = vmatprep.subr.bf16.mxu0 0
        %2379 = vmatpush2.bf16.msra.mxu0 0
        %2380 = vmatprep.mubr.bf16.mxu0 0
        %2381 = vmatmul.mubr.bf16.gmra.mxu0 %v2322
        %v2382 = vpop.f32.mrf.mxu0
        %v2383 = vadd.f32 0.0, %v2382
        %v2384 = vpop.f32.mrf.mxu0
        %v2385 = vpop.f32.mrf.mxu0
        %v2386 = vadd.f32 0.0, %v2385
        %v2387 = vpop.f32.mrf.mxu0
        %2388 = vmatprep.mubr.bf16.mxu0 0
        %2389 = vmatmul.mubr.bf16.gmra.mxu0 %v2325
        %v2390 = vpop.f32.mrf.mxu0
        %v2391 = vadd.f32 0.0, %v2390
        %v2392 = vpop.f32.mrf.mxu0
        %v2393 = vpop.f32.mrf.mxu0
        %v2394 = vadd.f32 0.0, %v2393
        %v2395 = vpop.f32.mrf.mxu0
        %2396 = vmatprep.mubr.bf16.mxu0 0
        %2397 = vmatmul.mubr.bf16.gmra.mxu0 %v2328
        %v2398 = vpop.f32.mrf.mxu0
        %v2399 = vadd.f32 0.0, %v2398
        %v2400 = vpop.f32.mrf.mxu0
        %v2401 = vpop.f32.mrf.mxu0
        %v2402 = vadd.f32 0.0, %v2401
        %v2403 = vpop.f32.mrf.mxu0
        %2404 = vmatprep.mubr.bf16.mxu0 0
        %2405 = vmatmul.mubr.bf16.gmra.mxu0 %v2331
        %v2406 = vpop.f32.mrf.mxu0
        %v2407 = vadd.f32 0.0, %v2406
        %v2408 = vpop.f32.mrf.mxu0
        %v2409 = vpop.f32.mrf.mxu0
        %v2410 = vadd.f32 0.0, %v2409
        %v2411 = vpop.f32.mrf.mxu0
        %2412 = vmatprep.mubr.bf16.mxu0 0
        %2413 = vmatmul.mubr.bf16.gmra.mxu0 %v2334
        %v2414 = vpop.f32.mrf.mxu0
        %v2415 = vadd.f32 0.0, %v2414
        %v2416 = vpop.f32.mrf.mxu0
        %v2417 = vpop.f32.mrf.mxu0
        %v2418 = vadd.f32 0.0, %v2417
        %v2419 = vpop.f32.mrf.mxu0
        %2420 = vmatprep.mubr.bf16.mxu0 0
        %2421 = vmatmul.mubr.bf16.gmra.mxu0 %v2337
        %v2422 = vpop.f32.mrf.mxu0
        %v2423 = vadd.f32 0.0, %v2422
        %v2424 = vpop.f32.mrf.mxu0
        %v2425 = vpop.f32.mrf.mxu0
        %v2426 = vadd.f32 0.0, %v2425
        %v2427 = vpop.f32.mrf.mxu0
        %2428 = vmatprep.mubr.bf16.mxu0 0
        %2429 = vmatmul.mubr.bf16.gmra.mxu0 %v2340
        %v2430 = vpop.f32.mrf.mxu0
        %v2431 = vadd.f32 0.0, %v2430
        %v2432 = vpop.f32.mrf.mxu0
        %v2433 = vpop.f32.mrf.mxu0
        %v2434 = vadd.f32 0.0, %v2433
        %v2435 = vpop.f32.mrf.mxu0
        %2436 = vmatprep.mubr.bf16.mxu0 0
        %2437 = vmatmul.mubr.bf16.gmra.mxu0 %v2343
        %v2438 = vpop.f32.mrf.mxu0
        %v2439 = vadd.f32 0.0, %v2438
        %v2440 = vpop.f32.mrf.mxu0
        %v2441 = vpop.f32.mrf.mxu0
        %v2442 = vadd.f32 0.0, %v2441
        %v2443 = vpop.f32.mrf.mxu0
        %2444 = vdwg.mxu0
        %v2445 = vadd.f32 %v2246, %v2383
        %v2446 = vadd.f32 %v2247, %v2386
        %v2447 = vadd.f32 %v2248, %v2391
        %v2448 = vadd.f32 %v2249, %v2394
        %v2449 = vadd.f32 %v2250, %v2399
        %v2450 = vadd.f32 %v2251, %v2402
        %v2451 = vadd.f32 %v2252, %v2407
        %v2452 = vadd.f32 %v2253, %v2410
        %v2453 = vadd.f32 %v2254, %v2415
        %v2454 = vadd.f32 %v2255, %v2418
        %v2455 = vadd.f32 %v2256, %v2423
        %v2456 = vadd.f32 %v2257, %v2426
        %v2457 = vadd.f32 %v2258, %v2431
        %v2458 = vadd.f32 %v2259, %v2434
        %v2459 = vadd.f32 %v2260, %v2439
        %v2460 = vadd.f32 %v2261, %v2442
        %s2461 = scalar_lea.vmem [#allocation2], 176
        %v2462 = vld [vmem:[%s2461] sm:$0xf]
        %v2463 = vld [vmem:[%s2461 + $0x4] sm:$0xf]
        %v2464 = vld [vmem:[%s2461 + $0x8] sm:$0xf]
        %v2465 = vld [vmem:[%s2461 + $0xc] sm:$0xf]
        %v2466 = vld [vmem:[%s2461 + $0x10] sm:$0xf]
        %v2467 = vld [vmem:[%s2461 + $0x14] sm:$0xf]
        %v2468 = vld [vmem:[%s2461 + $0x18] sm:$0xf]
        %v2469 = vld [vmem:[%s2461 + $0x1c] sm:$0xf]
        %v2470 = vld [vmem:[%s2461 + $0x20] sm:$0xf]
        %v2471 = vld [vmem:[%s2461 + $0x24] sm:$0xf]
        %v2472 = vld [vmem:[%s2461 + $0x28] sm:$0xf]
        %v2473 = vld [vmem:[%s2461 + $0x2c] sm:$0xf]
        %v2474 = vld [vmem:[%s2461 + $0x30] sm:$0xf]
        %v2475 = vld [vmem:[%s2461 + $0x34] sm:$0xf]
        %v2476 = vld [vmem:[%s2461 + $0x38] sm:$0xf]
        %v2477 = vld [vmem:[%s2461 + $0x3c] sm:$0xf]
        %s2478 = scalar_lea.vmem %s362, 16
        %v2479 = vld [vmem:[%s2478] sm:$0x3]
        %v2496 = vunpack.c.l.b16 %v2462
        %v2497 = vunpack.c.l.b16 %v2463
        %v2498 = vunpack.c.l.b16 %v2464
        %v2499 = vunpack.c.l.b16 %v2465
        %v2500 = vunpack.c.l.b16 %v2466
        %v2501 = vunpack.c.l.b16 %v2467
        %v2502 = vunpack.c.l.b16 %v2468
        %v2503 = vunpack.c.l.b16 %v2469
        %v2504 = vunpack.c.l.b16 %v2470
        %v2505 = vunpack.c.l.b16 %v2471
        %v2506 = vunpack.c.l.b16 %v2472
        %v2507 = vunpack.c.l.b16 %v2473
        %v2508 = vunpack.c.l.b16 %v2474
        %v2509 = vunpack.c.l.b16 %v2475
        %v2510 = vunpack.c.l.b16 %v2476
        %v2511 = vunpack.c.l.b16 %v2477
        %v2512 = vpack.c.b16 %v2497, %v2496
        %v2513 = vpack.c.b16 %v2499, %v2498
        %v2514 = vpack.c.b16 %v2501, %v2500
        %v2515 = vpack.c.b16 %v2503, %v2502
        %v2516 = vpack.c.b16 %v2505, %v2504
        %v2517 = vpack.c.b16 %v2507, %v2506
        %v2518 = vpack.c.b16 %v2509, %v2508
        %v2519 = vpack.c.b16 %v2511, %v2510
        %v2521 = vsel %vm978, %v2512, 0
        %v2524 = vsel %vm978, %v2513, 0
        %v2527 = vsel %vm978, %v2514, 0
        %v2530 = vsel %vm978, %v2515, 0
        %v2533 = vsel %vm978, %v2516, 0
        %v2536 = vsel %vm978, %v2517, 0
        %v2539 = vsel %vm978, %v2518, 0
        %v2542 = vsel %vm978, %v2519, 0
        %v2545 = vsel %vm1003, %v2479, 0
        %2547 = vmatprep.subr.bf16.mxu0 0
        %2548 = vmatpush1.bf16.msra.mxu0 0
        %2549 = vmatprep.subr.bf16.mxu0 0
        %2550 = vmatpush1.bf16.msra.mxu0 0
        %2551 = vmatprep.subr.bf16.mxu0 0
        %2552 = vmatpush1.bf16.msra.mxu0 0
        %2553 = vmatprep.subr.bf16.mxu0 0
        %2554 = vmatpush1.bf16.msra.mxu0 0
        %2555 = vmatprep.subr.bf16.mxu0 0
        %2556 = vmatpush1.bf16.msra.mxu0 0
        %2557 = vmatprep.subr.bf16.mxu0 0
        %2558 = vmatpush1.bf16.msra.mxu0 0
        %2559 = vmatprep.subr.bf16.mxu0 0
        %2560 = vmatpush1.bf16.msra.mxu0 0
        %2561 = vmatprep.subr.bf16.mxu0 0
        %2562 = vmatpush1.bf16.msra.mxu0 %v2545
        %2563 = vmatprep.subr.bf16.mxu0 0
        %2564 = vmatpush2.bf16.msra.mxu0 0
        %2565 = vmatprep.subr.bf16.mxu0 0
        %2566 = vmatpush2.bf16.msra.mxu0 0
        %2567 = vmatprep.subr.bf16.mxu0 0
        %2568 = vmatpush2.bf16.msra.mxu0 0
        %2569 = vmatprep.subr.bf16.mxu0 0
        %2570 = vmatpush2.bf16.msra.mxu0 0
        %2571 = vmatprep.subr.bf16.mxu0 0
        %2572 = vmatpush2.bf16.msra.mxu0 0
        %2573 = vmatprep.subr.bf16.mxu0 0
        %2574 = vmatpush2.bf16.msra.mxu0 0
        %2575 = vmatprep.subr.bf16.mxu0 0
        %2576 = vmatpush2.bf16.msra.mxu0 0
        %2577 = vmatprep.subr.bf16.mxu0 0
        %2578 = vmatpush2.bf16.msra.mxu0 0
        %2579 = vmatprep.mubr.bf16.mxu0 0
        %2580 = vmatmul.mubr.bf16.gmra.mxu0 %v2521
        %v2581 = vpop.f32.mrf.mxu0
        %v2582 = vadd.f32 0.0, %v2581
        %v2583 = vpop.f32.mrf.mxu0
        %v2584 = vpop.f32.mrf.mxu0
        %v2585 = vadd.f32 0.0, %v2584
        %v2586 = vpop.f32.mrf.mxu0
        %2587 = vmatprep.mubr.bf16.mxu0 0
        %2588 = vmatmul.mubr.bf16.gmra.mxu0 %v2524
        %v2589 = vpop.f32.mrf.mxu0
        %v2590 = vadd.f32 0.0, %v2589
        %v2591 = vpop.f32.mrf.mxu0
        %v2592 = vpop.f32.mrf.mxu0
        %v2593 = vadd.f32 0.0, %v2592
        %v2594 = vpop.f32.mrf.mxu0
        %2595 = vmatprep.mubr.bf16.mxu0 0
        %2596 = vmatmul.mubr.bf16.gmra.mxu0 %v2527
        %v2597 = vpop.f32.mrf.mxu0
        %v2598 = vadd.f32 0.0, %v2597
        %v2599 = vpop.f32.mrf.mxu0
        %v2600 = vpop.f32.mrf.mxu0
        %v2601 = vadd.f32 0.0, %v2600
        %v2602 = vpop.f32.mrf.mxu0
        %2603 = vmatprep.mubr.bf16.mxu0 0
        %2604 = vmatmul.mubr.bf16.gmra.mxu0 %v2530
        %v2605 = vpop.f32.mrf.mxu0
        %v2606 = vadd.f32 0.0, %v2605
        %v2607 = vpop.f32.mrf.mxu0
        %v2608 = vpop.f32.mrf.mxu0
        %v2609 = vadd.f32 0.0, %v2608
        %v2610 = vpop.f32.mrf.mxu0
        %2611 = vmatprep.mubr.bf16.mxu0 0
        %2612 = vmatmul.mubr.bf16.gmra.mxu0 %v2533
        %v2613 = vpop.f32.mrf.mxu0
        %v2614 = vadd.f32 0.0, %v2613
        %v2615 = vpop.f32.mrf.mxu0
        %v2616 = vpop.f32.mrf.mxu0
        %v2617 = vadd.f32 0.0, %v2616
        %v2618 = vpop.f32.mrf.mxu0
        %2619 = vmatprep.mubr.bf16.mxu0 0
        %2620 = vmatmul.mubr.bf16.gmra.mxu0 %v2536
        %v2621 = vpop.f32.mrf.mxu0
        %v2622 = vadd.f32 0.0, %v2621
        %v2623 = vpop.f32.mrf.mxu0
        %v2624 = vpop.f32.mrf.mxu0
        %v2625 = vadd.f32 0.0, %v2624
        %v2626 = vpop.f32.mrf.mxu0
        %2627 = vmatprep.mubr.bf16.mxu0 0
        %2628 = vmatmul.mubr.bf16.gmra.mxu0 %v2539
        %v2629 = vpop.f32.mrf.mxu0
        %v2630 = vadd.f32 0.0, %v2629
        %v2631 = vpop.f32.mrf.mxu0
        %v2632 = vpop.f32.mrf.mxu0
        %v2633 = vadd.f32 0.0, %v2632
        %v2634 = vpop.f32.mrf.mxu0
        %2635 = vmatprep.mubr.bf16.mxu0 0
        %2636 = vmatmul.mubr.bf16.gmra.mxu0 %v2542
        %v2637 = vpop.f32.mrf.mxu0
        %v2638 = vadd.f32 0.0, %v2637
        %v2639 = vpop.f32.mrf.mxu0
        %v2640 = vpop.f32.mrf.mxu0
        %v2641 = vadd.f32 0.0, %v2640
        %v2642 = vpop.f32.mrf.mxu0
        %2643 = vdwg.mxu0
        %v2644 = vadd.f32 %v2445, %v2582
        %v2645 = vadd.f32 %v2446, %v2585
        %v2646 = vadd.f32 %v2447, %v2590
        %v2647 = vadd.f32 %v2448, %v2593
        %v2648 = vadd.f32 %v2449, %v2598
        %v2649 = vadd.f32 %v2450, %v2601
        %v2650 = vadd.f32 %v2451, %v2606
        %v2651 = vadd.f32 %v2452, %v2609
        %v2652 = vadd.f32 %v2453, %v2614
        %v2653 = vadd.f32 %v2454, %v2617
        %v2654 = vadd.f32 %v2455, %v2622
        %v2655 = vadd.f32 %v2456, %v2625
        %v2656 = vadd.f32 %v2457, %v2630
        %v2657 = vadd.f32 %v2458, %v2633
        %v2658 = vadd.f32 %v2459, %v2638
        %v2659 = vadd.f32 %v2460, %v2641
        %v2660 = vld [vmem:[%s365] sm:$0x1]
        %v2662 = vlaneseq
        %v2663 = vshrl.u32 %v2662, 7
        %v2664 = vsub.s32 0, %v2663
        %v2665 = vrot.slane %v2660, %v2664
        %v2667 = vmul.f32 %v2644, %v2665
        %v2668 = vmul.f32 %v2645, %v2665
        %v2669 = vmul.f32 %v2646, %v2665
        %v2670 = vmul.f32 %v2647, %v2665
        %v2671 = vmul.f32 %v2648, %v2665
        %v2672 = vmul.f32 %v2649, %v2665
        %v2673 = vmul.f32 %v2650, %v2665
        %v2674 = vmul.f32 %v2651, %v2665
        %v2675 = vmul.f32 %v2652, %v2665
        %v2676 = vmul.f32 %v2653, %v2665
        %v2677 = vmul.f32 %v2654, %v2665
        %v2678 = vmul.f32 %v2655, %v2665
        %v2679 = vmul.f32 %v2656, %v2665
        %v2680 = vmul.f32 %v2657, %v2665
        %v2681 = vmul.f32 %v2658, %v2665
        %v2682 = vmul.f32 %v2659, %v2665
        %v2683 = vld [vmem:[%s368] sm:$0x1]
        %v2685 = vlaneseq
        %v2686 = vshrl.u32 %v2685, 7
        %v2687 = vsub.s32 0, %v2686
        %v2688 = vrot.slane %v2683, %v2687
        %v2690 = vadd.f32 %v2667, %v2688
        %v2691 = vadd.f32 %v2668, %v2688
        %v2692 = vadd.f32 %v2669, %v2688
        %v2693 = vadd.f32 %v2670, %v2688
        %v2694 = vadd.f32 %v2671, %v2688
        %v2695 = vadd.f32 %v2672, %v2688
        %v2696 = vadd.f32 %v2673, %v2688
        %v2697 = vadd.f32 %v2674, %v2688
        %v2698 = vadd.f32 %v2675, %v2688
        %v2699 = vadd.f32 %v2676, %v2688
        %v2700 = vadd.f32 %v2677, %v2688
        %v2701 = vadd.f32 %v2678, %v2688
        %v2702 = vadd.f32 %v2679, %v2688
        %v2703 = vadd.f32 %v2680, %v2688
        %v2704 = vadd.f32 %v2681, %v2688
        %v2705 = vadd.f32 %v2682, %v2688
        %vm2706 = vcmp.gt.f32.partialorder %v2690, 0.0
        %vm2707 = vcmp.gt.f32.partialorder %v2691, 0.0
        %vm2708 = vcmp.gt.f32.partialorder %v2692, 0.0
        %vm2709 = vcmp.gt.f32.partialorder %v2693, 0.0
        %vm2710 = vcmp.gt.f32.partialorder %v2694, 0.0
        %vm2711 = vcmp.gt.f32.partialorder %v2695, 0.0
        %vm2712 = vcmp.gt.f32.partialorder %v2696, 0.0
        %vm2713 = vcmp.gt.f32.partialorder %v2697, 0.0
        %vm2714 = vcmp.gt.f32.partialorder %v2698, 0.0
        %vm2715 = vcmp.gt.f32.partialorder %v2699, 0.0
        %vm2716 = vcmp.gt.f32.partialorder %v2700, 0.0
        %vm2717 = vcmp.gt.f32.partialorder %v2701, 0.0
        %vm2718 = vcmp.gt.f32.partialorder %v2702, 0.0
        %vm2719 = vcmp.gt.f32.partialorder %v2703, 0.0
        %vm2720 = vcmp.gt.f32.partialorder %v2704, 0.0
        %vm2721 = vcmp.gt.f32.partialorder %v2705, 0.0
        %v2722 = vmul.f32 %v2690, 0.01
        %v2723 = vmul.f32 %v2691, 0.01
        %v2724 = vmul.f32 %v2692, 0.01
        %v2725 = vmul.f32 %v2693, 0.01
        %v2726 = vmul.f32 %v2694, 0.01
        %v2727 = vmul.f32 %v2695, 0.01
        %v2728 = vmul.f32 %v2696, 0.01
        %v2729 = vmul.f32 %v2697, 0.01
        %v2730 = vmul.f32 %v2698, 0.01
        %v2731 = vmul.f32 %v2699, 0.01
        %v2732 = vmul.f32 %v2700, 0.01
        %v2733 = vmul.f32 %v2701, 0.01
        %v2734 = vmul.f32 %v2702, 0.01
        %v2735 = vmul.f32 %v2703, 0.01
        %v2736 = vmul.f32 %v2704, 0.01
        %v2737 = vmul.f32 %v2705, 0.01
        %v2738 = vsel %vm2706, %v2690, %v2722
        %v2739 = vsel %vm2707, %v2691, %v2723
        %v2740 = vsel %vm2708, %v2692, %v2724
        %v2741 = vsel %vm2709, %v2693, %v2725
        %v2742 = vsel %vm2710, %v2694, %v2726
        %v2743 = vsel %vm2711, %v2695, %v2727
        %v2744 = vsel %vm2712, %v2696, %v2728
        %v2745 = vsel %vm2713, %v2697, %v2729
        %v2746 = vsel %vm2714, %v2698, %v2730
        %v2747 = vsel %vm2715, %v2699, %v2731
        %v2748 = vsel %vm2716, %v2700, %v2732
        %v2749 = vsel %vm2717, %v2701, %v2733
        %v2750 = vsel %vm2718, %v2702, %v2734
        %v2751 = vsel %vm2719, %v2703, %v2735
        %v2752 = vsel %vm2720, %v2704, %v2736
        %v2753 = vsel %vm2721, %v2705, %v2737
        %2754 = vst [vmem:[%s328] sm:$0xff] %v2738
        %2755 = vst [vmem:[%s328 + $0x8] sm:$0xff] %v2739
        %2756 = vst [vmem:[%s328 + $0x10] sm:$0xff] %v2740
        %2757 = vst [vmem:[%s328 + $0x18] sm:$0xff] %v2741
        %2758 = vst [vmem:[%s328 + $0x20] sm:$0xff] %v2742
        %2759 = vst [vmem:[%s328 + $0x28] sm:$0xff] %v2743
        %2760 = vst [vmem:[%s328 + $0x30] sm:$0xff] %v2744
        %2761 = vst [vmem:[%s328 + $0x38] sm:$0xff] %v2745
        %2762 = vst [vmem:[%s328 + $0x40] sm:$0xff] %v2746
        %2763 = vst [vmem:[%s328 + $0x48] sm:$0xff] %v2747
        %2764 = vst [vmem:[%s328 + $0x50] sm:$0xff] %v2748
        %2765 = vst [vmem:[%s328 + $0x58] sm:$0xff] %v2749
        %2766 = vst [vmem:[%s328 + $0x60] sm:$0xff] %v2750
        %2767 = vst [vmem:[%s328 + $0x68] sm:$0xff] %v2751
        %2768 = vst [vmem:[%s328 + $0x70] sm:$0xff] %v2752
        %2769 = vst [vmem:[%s328 + $0x78] sm:$0xff] %v2753
        %s2770 = sand.u32 %s184, 1
        %s2771 = scalar_lea.sflag [#allocation4], %s2770
        %s2772 = sand.u32 %s184, 1
        %s2773 = smul.addr %s2772, 128
        %s2774 = scalar_lea.vmem [#allocation3], %s2773
        // Predicated region
        $region41: #{tpu_custom_call.1} parent=39 // pred_check
          %p2775 = pneg %p194
        $region42: #{tpu_custom_call.1} parent=39 // pred_check_branch
          %2777 = sbr.rel (%p2775) target = $region44
        $region43: #{tpu_custom_call.1} parent=39 // pred_region
          %s2778 = smul.u32 8, %s26
          %s2780 = ssub.s32 2048, 2048
          %2781 = vsyncadd %s2771, %s2780
          %s2782 = smul.addr %s2778, 2
          %s2783 = sadd.s32 %s24, %s2782
          %s2784 = smul.addr %s25, 32
          %s2785 = sadd.s32 %s2783, %s2784
          %s2786 = smul.addr %s2785, 128
          %s2787 = scalar_lea.hbm %s5, %s2786
          %s2788 = sshll.u32 %s2774, 4
          %s2789 = int_to_ptr.vmem [resolvable:$true] %s2788
          %2794 = dma.vmem_to_hbm [thread:$0]  %s2789, 2048, %s2787, %s2771, 128, 128, 8
        $region44: #{tpu_custom_call.1} parent=39 // pred_fallthru
          _
      $region40: #{tpu_custom_call.1} parent=5 // pred_fallthru
        _
      %p2795 = scmp.le.s32.totalorder 2, %s14
      // Predicated region
      $region45: #{tpu_custom_call.1} parent=5 // pred_check
        %p2796 = pneg %p2795
      $region46: #{tpu_custom_call.1} parent=5 // pred_check_branch
        %2798 = sbr.rel (%p2796) target = $region48
      $region47: #{tpu_custom_call.1} parent=5 // pred_region
        %s2799 = ssub.s32 %s14, 2
        // Predicated region
        $region49: #{tpu_custom_call.1} parent=47 // pred_check
          %p2800 = pneg %p200
        $region50: #{tpu_custom_call.1} parent=47 // pred_check_branch
          %2802 = sbr.rel (%p2800) target = $region52
        $region51: #{tpu_custom_call.1} parent=47 // pred_region
          %s2803 = sand.u32 %s185, 1
          %s2804 = scalar_lea.sflag [#allocation4], %s2803
          %s2805 = sand.u32 %s185, 1
          %s2806 = smul.addr %s2805, 128
          %s2807 = scalar_lea.vmem [#allocation3], %s2806
          %2808 = dma.done %s2804, 2048
        $region52: #{tpu_custom_call.1} parent=47 // pred_fallthru
          _
      $region48: #{tpu_custom_call.1} parent=5 // pred_fallthru
        _
    $region6: #{tpu_custom_call.1} parent=1 // loop_footer
      %s18 = sadd.s32 1, %s14
    $region7: #{tpu_custom_call.1} parent=1 // loop_footer_branch
      %13 = sbr.rel target = $region3
    $region8: #{tpu_custom_call.1} parent=1 // loop_exit
      _
    %2809 = vsyncpa [#allocation4], 1
    %s2810 = scalar_lea.sflag [#allocation4], 1
    %2811 = vsyncpa %s2810, 1

</llo_original>
